<compile_context>
chip_gen: v7x
topology: tpu7x:2x2x1
jax: 0.10.0
libtpu: 0.0.40
codegen_flags: <defaults>
</compile_context>

<pallas_src>
import numpy as np
import jax
import jax.numpy as jnp
from jax.experimental import pallas as pl
from jax.experimental.pallas import tpu as pltpu

HID = 100          # MLP hidden size
NK = 128           # MLP output size == number of spline knots
GRID_N = 256       # wn_iso is 256 x 256
PAD = 128          # feature padding for MXU-friendly matmuls
LOG_NORM = float(np.log(12661.0))

MIN_PHI = jnp.array([50.0, 0.0075], jnp.float32)
DPHI = jnp.array([40.0, 0.0492], jnp.float32)
SHIFT = jnp.array([70.0, 0.032], jnp.float32)
SCALE = jnp.array([20.0, 0.025], jnp.float32)


# ---------------------------------------------------------------------------
# Kernel 1: MLP (4 Linear layers + ReLUs).  The phi-normalisation affine is
# folded into (w1, b1) and the spline-coefficient basis matmul is folded into
# (w4, b4), so the kernel is 4 serially dependent MXU matmuls producing the
# concatenated [a | b | c | d] coefficient slab in one pass.
# ---------------------------------------------------------------------------
def _mlp_coeff_kernel(x_ref, w1, b1, w2, b2, w3, b3, w4f, b4f, o_ref):
    x = x_ref[...]                                                        # (BP, PAD)
    h = jnp.maximum(jnp.dot(x, w1[...], preferred_element_type=jnp.float32) + b1[...], 0.0)
    h = jnp.maximum(jnp.dot(h, w2[...], preferred_element_type=jnp.float32) + b2[...], 0.0)
    h = jnp.maximum(jnp.dot(h, w3[...], preferred_element_type=jnp.float32) + b3[...], 0.0)
    o_ref[...] = jnp.dot(h, w4f[...], preferred_element_type=jnp.float32) + b4f[...]


def mlp_coeff_pallas(x_pad, fused_params):
    bp = x_pad.shape[0]
    vspec = pl.BlockSpec(memory_space=pltpu.MemorySpace.VMEM)
    return pl.pallas_call(
        _mlp_coeff_kernel,
        out_shape=jax.ShapeDtypeStruct((bp, 4 * NK), jnp.float32),        # [a|b|c|d]
        in_specs=[vspec] * 9,
        out_specs=vspec,
    )(x_pad, *fused_params)


# ---------------------------------------------------------------------------
# Kernel 2: spline evaluation on the 256x256 wavenumber grid.  Segment indices
# are compile-time constants of wn_iso, so the coefficient planes arrive
# pre-gathered (one stacked (B,4,256,256) array) and the kernel is one Horner
# polynomial + exp (the /12661 is folded into the exponent).  Batch is the
# inner grid axis so the constant frac tile stays resident.
# ---------------------------------------------------------------------------
def _eval_kernel(f_ref, coef_ref, o_ref):
    f = f_ref[...]                                                        # (TR, 256)
    a = coef_ref[0, 0]
    b = coef_ref[0, 1]
    c = coef_ref[0, 2]
    d = coef_ref[0, 3]
    o_ref[0] = jnp.exp(a + f * (b + f * (c + f * d)) - LOG_NORM)


def spline_eval_pallas(frac, coef_planes):
    batch = coef_planes.shape[0]
    # Full-plane tile when B >= 2 (grid (1,B): batch axis feeds both v7x TCs);
    # half-plane tile when B == 1 so the grid still has 2 parallel steps.
    tr = GRID_N if batch >= 2 else GRID_N // 2
    return pl.pallas_call(
        _eval_kernel,
        out_shape=jax.ShapeDtypeStruct((batch, GRID_N, GRID_N), jnp.float32),
        grid=(GRID_N // tr, batch),
        in_specs=[
            pl.BlockSpec((tr, GRID_N), lambda r, b: (r, 0)),              # frac (const per r)
            pl.BlockSpec((1, 4, tr, GRID_N), lambda r, b: (b, 0, r, 0)),  # stacked a/b/c/d
        ],
        out_specs=pl.BlockSpec((1, tr, GRID_N), lambda r, b: (b, r, 0)),
        compiler_params=pltpu.CompilerParams(
            dimension_semantics=("parallel", "parallel")),
    )(frac, coef_planes)


# ---------------------------------------------------------------------------
# Glue: parameter init, constant buffers, precomputed spline basis, offline
# weight folding.
# ---------------------------------------------------------------------------
def init_params(key):
    ks = jax.random.split(key, 8)

    def linear(kw, kb, fan_in, fan_out):
        # small-scale deterministic init (keeps exp() in range for the demo)
        bound = 0.05 / np.sqrt(fan_in)
        w = jax.random.uniform(kw, (fan_in, fan_out), jnp.float32, -bound, bound)
        b = jax.random.uniform(kb, (fan_out,), jnp.float32, -bound, bound)
        return w, b

    w1, b1 = linear(ks[0], ks[1], 2, HID)
    w2, b2 = linear(ks[2], ks[3], HID, HID)
    w3, b3 = linear(ks[4], ks[5], HID, HID)
    w4, b4 = linear(ks[6], ks[7], HID, NK)
    return (w1, b1, w2, b2, w3, b3, w4, b4)


def make_buffers():
    # identical construction to the PyTorch module (numpy), cast to float32
    wn = (256 * np.fft.fftfreq(256, d=1.0)).reshape((256, 1))
    wn_iso64 = np.sqrt(wn ** 2 + np.moveaxis(wn, 0, 1) ** 2)
    wn_iso = wn_iso64.astype(np.float32)
    knots = np.fft.fftshift(wn_iso64).diagonal()[128:].astype(np.float32)
    # segment index & local offset: constants of (wn_iso, knots) -> precompute once.
    # matches torch.bucketize(t, knots, right=False) - 1 clamped to [0, NK-2].
    idx = np.clip(np.searchsorted(knots, wn_iso, side="left") - 1, 0, NK - 2).astype(np.int32)
    frac = (wn_iso - knots[idx]).astype(np.float32)
    return (jnp.asarray(knots), jnp.asarray(wn_iso),
            jnp.asarray(idx), jnp.asarray(frac))


def spline_basis_matrix(knots_np):
    """Precompute the (NK, 3*NK) float64 matrix M = [K | C | D] such that for y (B, NK):
         kd = y @ K   (knot derivatives; replaces the per-call tridiag solve)
         c  = y @ C   (quadratic coefficients)
         d  = y @ D   (cubic coefficients)
       Same formulation as torchcubicspline's natural cubic spline (a = y)."""
    kn = np.asarray(knots_np, dtype=np.float64)
    n = kn.shape[0]
    h = np.diff(kn)
    hr = 1.0 / h
    hrp = np.concatenate([hr, [0.0]])               # per-segment 1/h, zero-padded to n

    Dm = np.zeros((n, n))                           # diffs = y @ Dm
    S = np.zeros((n, n))                            # (M @ S)[:, j] = M[:, j-1]
    for j in range(n - 1):
        Dm[j, j] = -1.0
        Dm[j + 1, j] = 1.0
        S[j, j + 1] = 1.0

    P = Dm * (3.0 * hrp ** 2)[None, :]              # pds = y @ P
    R = P + P @ S                                   # rhs = y @ R
    diag = np.zeros(n)
    diag[:-1] += hr
    diag[1:] += hr
    A = np.diag(2.0 * diag) + np.diag(hr, 1) + np.diag(hr, -1)
    # TODO(synk): explicit inverse of the tridiagonal A (float64, precomputed once);
    #             mathematically exact but rounds differently from a per-call f32 solve.
    K = R @ np.linalg.inv(A)                        # kd = y @ K   (A symmetric)
    Kn = K @ S.T                                    # (y @ Kn)[:, j] = kd[:, j+1]

    C = Dm * (3.0 * hrp ** 2)[None, :] - (2.0 * K + Kn) * hrp[None, :]
    Dd = -2.0 * Dm * (hrp ** 3)[None, :] + (K + Kn) * (hrp ** 2)[None, :]
    return np.concatenate([K, C, Dd], axis=1)       # float64 (NK, 3*NK)


def prepare_params(params, kcd64, norm_phi=True):
    """Fold (a) the phi-normalisation affine into (w1, b1) and (b) the spline basis
    matmul into (w4, b4); pad everything to MXU-friendly shapes.  Done once offline."""
    w1, b1, w2, b2, w3, b3, w4, b4 = [np.asarray(p, np.float64) for p in params]
    min_phi = np.array([50.0, 0.0075]); dphi = np.array([40.0, 0.0492])
    shift = np.array([70.0, 0.032]);    scale = np.array([20.0, 0.025])
    if norm_phi:
        # CMBPS_norm applies the affine once, then CMBPS.forward applies it again
        mul = dphi * dphi / scale
        add = (min_phi * dphi + min_phi - shift) / scale
    else:
        mul = 1.0 / scale
        add = -shift / scale
    w1n = w1 * mul[:, None]
    b1n = b1 + add @ w1

    w4f = np.concatenate([w4, w4 @ kcd64], axis=1)   # (HID, 4*NK)
    b4f = np.concatenate([b4, b4 @ kcd64], axis=0)   # (4*NK,)

    def padw(w, cols):
        out = np.zeros((PAD, cols), np.float32)
        out[:w.shape[0], :w.shape[1]] = w
        return jnp.asarray(out)

    def padb(b, cols):
        out = np.zeros((1, cols), np.float32)
        out[0, :b.shape[0]] = b
        return jnp.asarray(out)

    return (padw(w1n, PAD), padb(b1n, PAD),
            padw(w2, PAD), padb(b2, PAD),
            padw(w3, PAD), padb(b3, PAD),
            padw(w4f, 4 * NK), padb(b4f, 4 * NK))


def cmbps_norm_forward(phi, fused_params, seg_idx, seg_frac):
    if phi.ndim == 1:
        phi = phi[None, :]
    phi = phi.astype(jnp.float32)
    B = phi.shape[0]
    bp = max(8, ((B + 7) // 8) * 8)                  # sublane-multiple batch padding

    # Raw phi, pre-padded in one op; normalisation is folded into w1/b1.
    x_pad = jnp.pad(phi, ((0, bp - B), (0, PAD - phi.shape[1])))

    # --- MLP + spline coefficients (one Pallas kernel, MXU) ---
    coef = mlp_coeff_pallas(x_pad, fused_params)     # (bp, 4*NK) = [a|b|c|d]
    coef = coef.reshape(bp, 4, NK)[:B]               # (B, 4, NK)

    # --- single stacked per-pixel segment-coefficient gather ---
    planes = jnp.take(coef, seg_idx, axis=-1)        # (B, 4, 256, 256)

    # --- Horner + exp on the 256x256 grid (Pallas, memory-bound) ---
    return spline_eval_pallas(seg_frac, planes)      # (B, 256, 256)


# ---------------------------------------------------------------------------
# Pure-JAX reference (original formulation, incl. jnp.linalg.solve) for the
# correctness check of the Pallas path.
# ---------------------------------------------------------------------------
def spline_coeffs_ref(knots, y):
    h = knots[1:] - knots[:-1]
    hr = 1.0 / h
    diffs = y[:, 1:] - y[:, :-1]
    pds = 3.0 * diffs * hr ** 2
    diag = (jnp.zeros((NK,), jnp.float32).at[:-1].set(hr).at[1:].add(hr)) * 2.0
    A = jnp.diag(diag) + jnp.diag(hr, 1) + jnp.diag(hr, -1)
    rhs = jnp.zeros_like(y).at[:, :-1].set(pds).at[:, 1:].add(pds)
    kd = jnp.linalg.solve(A, rhs.T).T
    a = y[:, :-1]
    b = kd[:, :-1]
    two_c = (6.0 * diffs * hr - 4.0 * kd[:, :-1] - 2.0 * kd[:, 1:]) * hr
    three_d = (-6.0 * diffs * hr + 3.0 * (kd[:, :-1] + kd[:, 1:])) * hr ** 2
    c = 0.5 * two_c
    d = three_d / 3.0
    pad = lambda z: jnp.pad(z, ((0, 0), (0, 1)))
    return pad(a), pad(b), pad(c), pad(d)


def reference_forward(phi, params, knots, wn_iso, norm_phi=True):
    if phi.ndim == 1:
        phi = phi[None, :]
    phi = phi.astype(jnp.float32)
    if norm_phi:
        phi = phi * DPHI + MIN_PHI
        phi = phi * DPHI + MIN_PHI
    phi = (phi - SHIFT) / SCALE
    w1, b1, w2, b2, w3, b3, w4, b4 = params
    h = jnp.maximum(phi @ w1 + b1, 0.0)
    h = jnp.maximum(h @ w2 + b2, 0.0)
    h = jnp.maximum(h @ w3 + b3, 0.0)
    y = h @ w4 + b4
    a, b, c, d = spline_coeffs_ref(knots, y)
    idx = jnp.clip(jnp.searchsorted(knots, wn_iso, side="left") - 1, 0, NK - 2)
    f = (wn_iso - knots[idx])[None]
    val = a[:, idx] + f * (b[:, idx] + f * (c[:, idx] + f * d[:, idx]))
    return jnp.exp(val) / 12661.0


if __name__ == "__main__":
    key = jax.random.PRNGKey(0)
    kparam, kphi = jax.random.split(key)

    params = init_params(kparam)
    knots, wn_iso, seg_idx, seg_frac = make_buffers()
    kcd64 = spline_basis_matrix(np.asarray(knots))
    fused = prepare_params(params, kcd64, norm_phi=True)

    phi = jax.random.uniform(kphi, (2, 2), jnp.float32)   # batch=2 cosmological params

    fwd = jax.jit(lambda p: cmbps_norm_forward(p, fused, seg_idx, seg_frac))
    out = jax.block_until_ready(fwd(phi))
    assert out.shape == (2, GRID_N, GRID_N) and out.dtype == jnp.float32

    ref = jax.block_until_ready(reference_forward(phi, params, knots, wn_iso, norm_phi=True))
    if not bool(jnp.allclose(out, ref, rtol=2e-2, atol=1e-8)):
        raise AssertionError("Pallas result does not match JAX reference")

    print("KERNEL_OK")
</pallas_src>

<mosaic_0001>
module attributes {stable_mosaic.version = 11 : i64} {
  func.func @_mlp_coeff_kernel(%arg0: memref<8x128xf32, #tpu.memory_space<vmem>>, %arg1: memref<128x128xf32, #tpu.memory_space<vmem>>, %arg2: memref<1x128xf32, #tpu.memory_space<vmem>>, %arg3: memref<128x128xf32, #tpu.memory_space<vmem>>, %arg4: memref<1x128xf32, #tpu.memory_space<vmem>>, %arg5: memref<128x128xf32, #tpu.memory_space<vmem>>, %arg6: memref<1x128xf32, #tpu.memory_space<vmem>>, %arg7: memref<128x512xf32, #tpu.memory_space<vmem>>, %arg8: memref<1x512xf32, #tpu.memory_space<vmem>>, %arg9: memref<8x512xf32, #tpu.memory_space<vmem>>) attributes {dimension_semantics = [], scalar_prefetch = 0 : i64, scratch_operands = 0 : i64, tpu.core_type = #tpu.core_type<tc>} {
    %c0 = arith.constant 0 : index
    %c0_0 = arith.constant 0 : index
    %0 = vector.load %arg0[%c0, %c0_0] : memref<8x128xf32, #tpu.memory_space<vmem>>, vector<8x128xf32>
    %c0_1 = arith.constant 0 : index
    %c0_2 = arith.constant 0 : index
    %1 = vector.load %arg1[%c0_1, %c0_2] : memref<128x128xf32, #tpu.memory_space<vmem>>, vector<128x128xf32>
    %cst = arith.constant dense<0.000000e+00> : vector<8x128xf32>
    %2 = tpu.matmul %0, %1, %cst {dimension_numbers = #tpu.dot_dimension_numbers<[1], [0], [0], [1], [0, 0, 1, 1], [], []>} : vector<8x128xf32>, vector<128x128xf32>, vector<8x128xf32> -> vector<8x128xf32>
    %c0_3 = arith.constant 0 : index
    %c0_4 = arith.constant 0 : index
    %3 = vector.load %arg2[%c0_3, %c0_4] : memref<1x128xf32, #tpu.memory_space<vmem>>, vector<1x128xf32>
    %4 = vector.broadcast %3 : vector<1x128xf32> to vector<8x128xf32>
    %5 = arith.addf %2, %4 : vector<8x128xf32>
    %cst_5 = arith.constant 0.000000e+00 : f32
    %6 = vector.broadcast %cst_5 : f32 to vector<8x128xf32>
    %7 = arith.maximumf %5, %6 : vector<8x128xf32>
    %c0_6 = arith.constant 0 : index
    %c0_7 = arith.constant 0 : index
    %8 = vector.load %arg3[%c0_6, %c0_7] : memref<128x128xf32, #tpu.memory_space<vmem>>, vector<128x128xf32>
    %cst_8 = arith.constant dense<0.000000e+00> : vector<8x128xf32>
    %9 = tpu.matmul %7, %8, %cst_8 {dimension_numbers = #tpu.dot_dimension_numbers<[1], [0], [0], [1], [0, 0, 1, 1], [], []>} : vector<8x128xf32>, vector<128x128xf32>, vector<8x128xf32> -> vector<8x128xf32>
    %c0_9 = arith.constant 0 : index
    %c0_10 = arith.constant 0 : index
    %10 = vector.load %arg4[%c0_9, %c0_10] : memref<1x128xf32, #tpu.memory_space<vmem>>, vector<1x128xf32>
    %11 = vector.broadcast %10 : vector<1x128xf32> to vector<8x128xf32>
    %12 = arith.addf %9, %11 : vector<8x128xf32>
    %cst_11 = arith.constant 0.000000e+00 : f32
    %13 = vector.broadcast %cst_11 : f32 to vector<8x128xf32>
    %14 = arith.maximumf %12, %13 : vector<8x128xf32>
    %c0_12 = arith.constant 0 : index
    %c0_13 = arith.constant 0 : index
    %15 = vector.load %arg5[%c0_12, %c0_13] : memref<128x128xf32, #tpu.memory_space<vmem>>, vector<128x128xf32>
    %cst_14 = arith.constant dense<0.000000e+00> : vector<8x128xf32>
    %16 = tpu.matmul %14, %15, %cst_14 {dimension_numbers = #tpu.dot_dimension_numbers<[1], [0], [0], [1], [0, 0, 1, 1], [], []>} : vector<8x128xf32>, vector<128x128xf32>, vector<8x128xf32> -> vector<8x128xf32>
    %c0_15 = arith.constant 0 : index
    %c0_16 = arith.constant 0 : index
    %17 = vector.load %arg6[%c0_15, %c0_16] : memref<1x128xf32, #tpu.memory_space<vmem>>, vector<1x128xf32>
    %18 = vector.broadcast %17 : vector<1x128xf32> to vector<8x128xf32>
    %19 = arith.addf %16, %18 : vector<8x128xf32>
    %cst_17 = arith.constant 0.000000e+00 : f32
    %20 = vector.broadcast %cst_17 : f32 to vector<8x128xf32>
    %21 = arith.maximumf %19, %20 : vector<8x128xf32>
    %c0_18 = arith.constant 0 : index
    %c0_19 = arith.constant 0 : index
    %22 = vector.load %arg7[%c0_18, %c0_19] : memref<128x512xf32, #tpu.memory_space<vmem>>, vector<128x512xf32>
    %cst_20 = arith.constant dense<0.000000e+00> : vector<8x512xf32>
    %23 = tpu.matmul %21, %22, %cst_20 {dimension_numbers = #tpu.dot_dimension_numbers<[1], [0], [0], [1], [0, 0, 1, 1], [], []>} : vector<8x128xf32>, vector<128x512xf32>, vector<8x512xf32> -> vector<8x512xf32>
    %c0_21 = arith.constant 0 : index
    %c0_22 = arith.constant 0 : index
    %24 = vector.load %arg8[%c0_21, %c0_22] : memref<1x512xf32, #tpu.memory_space<vmem>>, vector<1x512xf32>
    %25 = vector.broadcast %24 : vector<1x512xf32> to vector<8x512xf32>
    %26 = arith.addf %23, %25 : vector<8x512xf32>
    %c0_23 = arith.constant 0 : index
    %c0_24 = arith.constant 0 : index
    %27 = vector.load %arg9[%c0_23, %c0_24] : memref<8x512xf32, #tpu.memory_space<vmem>>, vector<8x512xf32>
    tpu.vector_store %arg9[%c0_23, %c0_24], %26 {strides = array<i32>} : memref<8x512xf32, #tpu.memory_space<vmem>>, vector<8x512xf32>,
    return
  }
}

module attributes {stable_mosaic.version = 11 : i64} {
  func.func @_eval_kernel(%arg0: i32, %arg1: i32, %arg2: memref<256x256xf32, #tpu.memory_space<vmem>>, %arg3: memref<1x4x256x256xf32, #tpu.memory_space<vmem>>, %arg4: memref<1x256x256xf32, #tpu.memory_space<vmem>>) attributes {dimension_semantics = [#tpu.dimension_semantics<parallel>, #tpu.dimension_semantics<parallel>], iteration_bounds = array<i64: 1, 2>, scalar_prefetch = 0 : i64, scratch_operands = 0 : i64, tpu.core_type = #tpu.core_type<tc>, window_params = [{transform_indices = @transform_0, window_bounds = array<i64: 256, 256>}, {transform_indices = @transform_1, window_bounds = array<i64: 1, 4, 256, 256>}, {transform_indices = @transform_2, window_bounds = array<i64: 1, 256, 256>}]} {
    %c0 = arith.constant 0 : index
    %c0_0 = arith.constant 0 : index
    %0 = vector.load %arg2[%c0, %c0_0] : memref<256x256xf32, #tpu.memory_space<vmem>>, vector<256x256xf32>
    %c0_1 = arith.constant 0 : index
    %c0_2 = arith.constant 0 : index
    %c0_3 = arith.constant 0 : index
    %c0_4 = arith.constant 0 : index
    %1 = vector.load %arg3[%c0_1, %c0_2, %c0_3, %c0_4] : memref<1x4x256x256xf32, #tpu.memory_space<vmem>>, vector<1x1x256x256xf32>
    %2 = vector.shape_cast %1 : vector<1x1x256x256xf32> to vector<256x256xf32>
    %c0_5 = arith.constant 0 : index
    %c1 = arith.constant 1 : index
    %c0_6 = arith.constant 0 : index
    %c0_7 = arith.constant 0 : index
    %3 = vector.load %arg3[%c0_5, %c1, %c0_6, %c0_7] : memref<1x4x256x256xf32, #tpu.memory_space<vmem>>, vector<1x1x256x256xf32>
    %4 = vector.shape_cast %3 : vector<1x1x256x256xf32> to vector<256x256xf32>
    %c0_8 = arith.constant 0 : index
    %c2 = arith.constant 2 : index
    %c0_9 = arith.constant 0 : index
    %c0_10 = arith.constant 0 : index
    %5 = vector.load %arg3[%c0_8, %c2, %c0_9, %c0_10] : memref<1x4x256x256xf32, #tpu.memory_space<vmem>>, vector<1x1x256x256xf32>
    %6 = vector.shape_cast %5 : vector<1x1x256x256xf32> to vector<256x256xf32>
    %c0_11 = arith.constant 0 : index
    %c3 = arith.constant 3 : index
    %c0_12 = arith.constant 0 : index
    %c0_13 = arith.constant 0 : index
    %7 = vector.load %arg3[%c0_11, %c3, %c0_12, %c0_13] : memref<1x4x256x256xf32, #tpu.memory_space<vmem>>, vector<1x1x256x256xf32>
    %8 = vector.shape_cast %7 : vector<1x1x256x256xf32> to vector<256x256xf32>
    %9 = arith.mulf %0, %8 : vector<256x256xf32>
    %10 = arith.addf %6, %9 : vector<256x256xf32>
    %11 = arith.mulf %0, %10 : vector<256x256xf32>
    %12 = arith.addf %4, %11 : vector<256x256xf32>
    %13 = arith.mulf %0, %12 : vector<256x256xf32>
    %14 = arith.addf %2, %13 : vector<256x256xf32>
    %cst = arith.constant 9.44628143 : f32
    %15 = vector.broadcast %cst : f32 to vector<256x256xf32>
    %16 = arith.subf %14, %15 : vector<256x256xf32>
    %17 = math.exp %16 : vector<256x256xf32>
    %c0_14 = arith.constant 0 : index
    %c0_15 = arith.constant 0 : index
    %c0_16 = arith.constant 0 : index
    %18 = vector.load %arg4[%c0_14, %c0_15, %c0_16] : memref<1x256x256xf32, #tpu.memory_space<vmem>>, vector<1x256x256xf32>
    %19 = vector.shape_cast %18 : vector<1x256x256xf32> to vector<256x256xf32>
    %20 = vector.shape_cast %17 : vector<256x256xf32> to vector<1x256x256xf32>
    tpu.vector_store %arg4[%c0_14, %c0_15, %c0_16], %20 {strides = array<i32>} : memref<1x256x256xf32, #tpu.memory_space<vmem>>, vector<1x256x256xf32>,
    return
  }
  func.func @transform_0(%arg0: i32, %arg1: i32) -> (i32, i32) {
    %c0_i32 = arith.constant 0 : i32
    %c0_i32_0 = arith.constant 0 : i32
    return %arg0, %c0_i32 : i32, i32
  }
  func.func @transform_1(%arg0: i32, %arg1: i32) -> (i32, i32, i32, i32) {
    %c0_i32 = arith.constant 0 : i32
    %c0_i32_0 = arith.constant 0 : i32
    %c0_i32_1 = arith.constant 0 : i32
    return %arg1, %c0_i32, %arg0, %c0_i32_0 : i32, i32, i32, i32
  }
  func.func @transform_2(%arg0: i32, %arg1: i32) -> (i32, i32, i32) {
    %c0_i32 = arith.constant 0 : i32
    %c0_i32_0 = arith.constant 0 : i32
    return %arg1, %arg0, %c0_i32 : i32, i32, i32
  }
}

</mosaic_0001>

<llo_original>
// kernel: _lambda_.2
$region0: #{_lambda_.2}
  #allocation0 [shape = 'u32[]', space=smem, size = 0x4, offset = 0x4, fixed_abs, tag = 'smem constant byte address 0x4 - core index']
  #allocation1 [shape = 'u32[144,128]{1,0:T(1,128)}', space=vmem, size = 0x12000, scoped, tag = 'internal scratch']
  %s0 = inlined_call_operand.vmem [shape: f32[8,128], index: 0, kind: input, shape index: {}]
  %s1 = inlined_call_operand.hbm [shape: f32[128,128], index: 1, kind: input, shape index: {}]
  %s2 = inlined_call_operand.hbm [shape: f32[1,128], index: 2, kind: input, shape index: {}]
  %s3 = inlined_call_operand.hbm [shape: f32[128,128], index: 3, kind: input, shape index: {}]
  %s4 = inlined_call_operand.hbm [shape: f32[1,128], index: 4, kind: input, shape index: {}]
  %s5 = inlined_call_operand.hbm [shape: f32[128,128], index: 5, kind: input, shape index: {}]
  %s6 = inlined_call_operand.hbm [shape: f32[1,128], index: 6, kind: input, shape index: {}]
  %s7 = inlined_call_operand.hbm [shape: f32[128,512], index: 7, kind: input, shape index: {}]
  %s8 = inlined_call_operand.hbm [shape: f32[1,512], index: 8, kind: input, shape index: {}]
  %s9 = inlined_call_operand.vmem [shape: f32[8,512], index: 9, kind: output, shape index: {}]
  %s10 = sld [smem:[#allocation0]]
  $region78: #{_lambda_.2} parent=0
    _
  %s12 = ssub.s32 1, %s10
  %s13 = scalar_select 0, %s12, %s10
  $region1: #{_lambda_.2} parent=0
    #allocation2 [shape = 'u8[65536]{0}', space=vmem, size = 0x10000, scoped, tag = 'input window, operand 1, single buffered']
    #allocation3 [shape = 's32[1]{0}', space=sflag, size = 0x4, scoped, tag = 'scoped memory for _lambda_.2']
    #allocation4 [shape = 'u8[512]{0}', space=vmem, size = 0x400, scoped, tag = 'input window, operand 2, single buffered']
    #allocation5 [shape = 's32[1]{0}', space=sflag, size = 0x4, scoped, tag = 'scoped memory for _lambda_.2']
    #allocation6 [shape = 'u8[65536]{0}', space=vmem, size = 0x10000, scoped, tag = 'input window, operand 3, single buffered']
    #allocation7 [shape = 'u8[512]{0}', space=vmem, size = 0x400, scoped, tag = 'input window, operand 4, single buffered']
    #allocation8 [shape = 's32[1]{0}', space=sflag, size = 0x4, scoped, tag = 'scoped memory for _lambda_.2']
    #allocation9 [shape = 'u8[65536]{0}', space=vmem, size = 0x10000, scoped, tag = 'input window, operand 5, single buffered']
    #allocation10 [shape = 'u8[512]{0}', space=vmem, size = 0x400, scoped, tag = 'input window, operand 6, single buffered']
    #allocation11 [shape = 's32[1]{0}', space=sflag, size = 0x4, scoped, tag = 'scoped memory for _lambda_.2']
    #allocation12 [shape = 'u8[262144]{0}', space=vmem, size = 0x40000, scoped, tag = 'input window, operand 7, single buffered']
    #allocation13 [shape = 'u8[2048]{0}', space=vmem, size = 0x800, scoped, tag = 'input window, operand 8, single buffered']
    #allocation14 [shape = 's32[1]{0}', space=sflag, size = 0x4, scoped, tag = 'scoped memory for _lambda_.2']
    %14 = vsyncpa [#allocation3], 0
    %15 = vsyncpa [#allocation5], 0
    %16 = vsyncpa [#allocation8], 0
    %17 = vsyncpa [#allocation11], 0
    %18 = vsyncpa [#allocation14], 0
    // Predicated region
    $region2: #{_lambda_.2} parent=1 // pred_check
      _
    $region3: #{_lambda_.2} parent=1 // pred_check_branch
      %20 = sbr.rel (0) target = $region5
    $region4: #{_lambda_.2} parent=1 // pred_region
      _
    $region5: #{_lambda_.2} parent=1 // pred_fallthru
      _
    // Predicated region
    $region6: #{_lambda_.2} parent=1 // pred_check
      _
    $region7: #{_lambda_.2} parent=1 // pred_check_branch
      %22 = sbr.rel (0) target = $region9
    $region8: #{_lambda_.2} parent=1 // pred_region
      %s24 = ssub.s32 2048, 2048
      %25 = vsyncadd [#allocation3], %s24
      %s26 = sshll.u32 [#allocation2], 4
      %s27 = int_to_ptr.vmem [resolvable:$true] %s26
      %32 = dma.hbm_to_vmem [thread:$0]  %s1, 2048, %s27, [#allocation3], 128, 128, 8
    $region9: #{_lambda_.2} parent=1 // pred_fallthru
      _
    // Predicated region
    $region10: #{_lambda_.2} parent=1 // pred_check
      _
    $region11: #{_lambda_.2} parent=1 // pred_check_branch
      %34 = sbr.rel (0) target = $region13
    $region12: #{_lambda_.2} parent=1 // pred_region
      %s36 = ssub.s32 16, 16
      %37 = vsyncadd [#allocation5], %s36
      %s39 = sshll.u32 [#allocation4], 4
      %s40 = int_to_ptr.vmem [resolvable:$true] %s39
      %42 = dma.hbm_to_vmem [thread:$0]  %s2, 16, %s40, [#allocation5]
    $region13: #{_lambda_.2} parent=1 // pred_fallthru
      _
    // Predicated region
    $region14: #{_lambda_.2} parent=1 // pred_check
      _
    $region15: #{_lambda_.2} parent=1 // pred_check_branch
      %44 = sbr.rel (0) target = $region17
    $region16: #{_lambda_.2} parent=1 // pred_region
      %s46 = ssub.s32 2048, 2048
      %47 = vsyncadd [#allocation5], %s46
      %s48 = sshll.u32 [#allocation6], 4
      %s49 = int_to_ptr.vmem [resolvable:$true] %s48
      %54 = dma.hbm_to_vmem [thread:$0]  %s3, 2048, %s49, [#allocation5], 128, 128, 8
    $region17: #{_lambda_.2} parent=1 // pred_fallthru
      _
    // Predicated region
    $region18: #{_lambda_.2} parent=1 // pred_check
      _
    $region19: #{_lambda_.2} parent=1 // pred_check_branch
      %56 = sbr.rel (0) target = $region21
    $region20: #{_lambda_.2} parent=1 // pred_region
      %s58 = ssub.s32 16, 16
      %59 = vsyncadd [#allocation8], %s58
      %s61 = sshll.u32 [#allocation7], 4
      %s62 = int_to_ptr.vmem [resolvable:$true] %s61
      %64 = dma.hbm_to_vmem [thread:$0]  %s4, 16, %s62, [#allocation8]
    $region21: #{_lambda_.2} parent=1 // pred_fallthru
      _
    // Predicated region
    $region22: #{_lambda_.2} parent=1 // pred_check
      _
    $region23: #{_lambda_.2} parent=1 // pred_check_branch
      %66 = sbr.rel (0) target = $region25
    $region24: #{_lambda_.2} parent=1 // pred_region
      %s68 = ssub.s32 2048, 2048
      %69 = vsyncadd [#allocation8], %s68
      %s70 = sshll.u32 [#allocation9], 4
      %s71 = int_to_ptr.vmem [resolvable:$true] %s70
      %76 = dma.hbm_to_vmem [thread:$0]  %s5, 2048, %s71, [#allocation8], 128, 128, 8
    $region25: #{_lambda_.2} parent=1 // pred_fallthru
      _
    // Predicated region
    $region26: #{_lambda_.2} parent=1 // pred_check
      _
    $region27: #{_lambda_.2} parent=1 // pred_check_branch
      %78 = sbr.rel (0) target = $region29
    $region28: #{_lambda_.2} parent=1 // pred_region
      %s80 = ssub.s32 16, 16
      %81 = vsyncadd [#allocation11], %s80
      %s83 = sshll.u32 [#allocation10], 4
      %s84 = int_to_ptr.vmem [resolvable:$true] %s83
      %86 = dma.hbm_to_vmem [thread:$0]  %s6, 16, %s84, [#allocation11]
    $region29: #{_lambda_.2} parent=1 // pred_fallthru
      _
    // Predicated region
    $region30: #{_lambda_.2} parent=1 // pred_check
      _
    $region31: #{_lambda_.2} parent=1 // pred_check_branch
      %88 = sbr.rel (0) target = $region33
    $region32: #{_lambda_.2} parent=1 // pred_region
      %s90 = ssub.s32 8192, 8192
      %91 = vsyncadd [#allocation11], %s90
      %s92 = sshll.u32 [#allocation12], 4
      %s93 = int_to_ptr.vmem [resolvable:$true] %s92
      %98 = dma.hbm_to_vmem [thread:$0]  %s7, 8192, %s93, [#allocation11], 512, 512, 32
    $region33: #{_lambda_.2} parent=1 // pred_fallthru
      _
    // Predicated region
    $region34: #{_lambda_.2} parent=1 // pred_check
      _
    $region35: #{_lambda_.2} parent=1 // pred_check_branch
      %100 = sbr.rel (0) target = $region37
    $region36: #{_lambda_.2} parent=1 // pred_region
      %s102 = ssub.s32 64, 64
      %103 = vsyncadd [#allocation14], %s102
      %s105 = sshll.u32 [#allocation13], 4
      %s106 = int_to_ptr.vmem [resolvable:$true] %s105
      %108 = dma.hbm_to_vmem [thread:$0]  %s8, 64, %s106, [#allocation14]
    $region37: #{_lambda_.2} parent=1 // pred_fallthru
      _
    // Predicated region
    $region38: #{_lambda_.2} parent=1 // pred_check
      _
    $region39: #{_lambda_.2} parent=1 // pred_check_branch
      %110 = sbr.rel (0) target = $region41
    $region40: #{_lambda_.2} parent=1 // pred_region
      %111 = dma.done [#allocation3], 2048
    $region41: #{_lambda_.2} parent=1 // pred_fallthru
      _
    // Predicated region
    $region42: #{_lambda_.2} parent=1 // pred_check
      _
    $region43: #{_lambda_.2} parent=1 // pred_check_branch
      %113 = sbr.rel (0) target = $region45
    $region44: #{_lambda_.2} parent=1 // pred_region
      %114 = dma.done [#allocation5], 16
    $region45: #{_lambda_.2} parent=1 // pred_fallthru
      _
    // Predicated region
    $region46: #{_lambda_.2} parent=1 // pred_check
      _
    $region47: #{_lambda_.2} parent=1 // pred_check_branch
      %116 = sbr.rel (0) target = $region49
    $region48: #{_lambda_.2} parent=1 // pred_region
      %117 = dma.done [#allocation5], 2048
    $region49: #{_lambda_.2} parent=1 // pred_fallthru
      _
    // Predicated region
    $region50: #{_lambda_.2} parent=1 // pred_check
      _
    $region51: #{_lambda_.2} parent=1 // pred_check_branch
      %119 = sbr.rel (0) target = $region53
    $region52: #{_lambda_.2} parent=1 // pred_region
      %120 = dma.done [#allocation8], 16
    $region53: #{_lambda_.2} parent=1 // pred_fallthru
      _
    // Predicated region
    $region54: #{_lambda_.2} parent=1 // pred_check
      _
    $region55: #{_lambda_.2} parent=1 // pred_check_branch
      %122 = sbr.rel (0) target = $region57
    $region56: #{_lambda_.2} parent=1 // pred_region
      %123 = dma.done [#allocation8], 2048
    $region57: #{_lambda_.2} parent=1 // pred_fallthru
      _
    // Predicated region
    $region58: #{_lambda_.2} parent=1 // pred_check
      _
    $region59: #{_lambda_.2} parent=1 // pred_check_branch
      %125 = sbr.rel (0) target = $region61
    $region60: #{_lambda_.2} parent=1 // pred_region
      %126 = dma.done [#allocation11], 16
    $region61: #{_lambda_.2} parent=1 // pred_fallthru
      _
    // Predicated region
    $region62: #{_lambda_.2} parent=1 // pred_check
      _
    $region63: #{_lambda_.2} parent=1 // pred_check_branch
      %128 = sbr.rel (0) target = $region65
    $region64: #{_lambda_.2} parent=1 // pred_region
      %129 = dma.done [#allocation11], 8192
    $region65: #{_lambda_.2} parent=1 // pred_fallthru
      _
    // Predicated region
    $region66: #{_lambda_.2} parent=1 // pred_check
      _
    $region67: #{_lambda_.2} parent=1 // pred_check_branch
      %131 = sbr.rel (0) target = $region69
    $region68: #{_lambda_.2} parent=1 // pred_region
      %132 = dma.done [#allocation14], 64
    $region69: #{_lambda_.2} parent=1 // pred_fallthru
      _
    %v133 = vld [vmem:[%s0] sm:$0xff]
    %v134 = vld [vmem:[#allocation2] sm:$0xff]
    %v135 = vld [vmem:[#allocation2 + $0x8] sm:$0xff]
    %v136 = vld [vmem:[#allocation2 + $0x10] sm:$0xff]
    %v137 = vld [vmem:[#allocation2 + $0x18] sm:$0xff]
    %v138 = vld [vmem:[#allocation2 + $0x20] sm:$0xff]
    %v139 = vld [vmem:[#allocation2 + $0x28] sm:$0xff]
    %v140 = vld [vmem:[#allocation2 + $0x30] sm:$0xff]
    %v141 = vld [vmem:[#allocation2 + $0x38] sm:$0xff]
    %v142 = vld [vmem:[#allocation2 + $0x40] sm:$0xff]
    %v143 = vld [vmem:[#allocation2 + $0x48] sm:$0xff]
    %v144 = vld [vmem:[#allocation2 + $0x50] sm:$0xff]
    %v145 = vld [vmem:[#allocation2 + $0x58] sm:$0xff]
    %v146 = vld [vmem:[#allocation2 + $0x60] sm:$0xff]
    %v147 = vld [vmem:[#allocation2 + $0x68] sm:$0xff]
    %v148 = vld [vmem:[#allocation2 + $0x70] sm:$0xff]
    %v149 = vld [vmem:[#allocation2 + $0x78] sm:$0xff]
    %v150 = vld [vmem:[#allocation4] sm:$0x1]
    %v152 = vlaneseq
    %v153 = vshrl.u32 %v152, 7
    %v154 = vsub.s32 0, %v153
    %v155 = vrot.slane %v150, %v154
    %157 = vmatprep.subr.mxu0 0.0
    %158 = vmatpush1.msra.mxu0 %v134
    %159 = vmatprep.subr.mxu0 0.0
    %160 = vmatpush1.msra.mxu0 %v135
    %161 = vmatprep.subr.mxu0 0.0
    %162 = vmatpush1.msra.mxu0 %v136
    %163 = vmatprep.subr.mxu0 0.0
    %164 = vmatpush1.msra.mxu0 %v137
    %165 = vmatprep.subr.mxu0 0.0
    %166 = vmatpush1.msra.mxu0 %v138
    %167 = vmatprep.subr.mxu0 0.0
    %168 = vmatpush1.msra.mxu0 %v139
    %169 = vmatprep.subr.mxu0 0.0
    %170 = vmatpush1.msra.mxu0 %v140
    %171 = vmatprep.subr.mxu0 0.0
    %172 = vmatpush1.msra.mxu0 %v141
    %173 = vmatprep.subr.mxu0 0.0
    %174 = vmatpush1.msra.mxu0 %v142
    %175 = vmatprep.subr.mxu0 0.0
    %176 = vmatpush1.msra.mxu0 %v143
    %177 = vmatprep.subr.mxu0 0.0
    %178 = vmatpush1.msra.mxu0 %v144
    %179 = vmatprep.subr.mxu0 0.0
    %180 = vmatpush1.msra.mxu0 %v145
    %181 = vmatprep.subr.mxu0 0.0
    %182 = vmatpush1.msra.mxu0 %v146
    %183 = vmatprep.subr.mxu0 0.0
    %184 = vmatpush1.msra.mxu0 %v147
    %185 = vmatprep.subr.mxu0 0.0
    %186 = vmatpush1.msra.mxu0 %v148
    %187 = vmatprep.subr.mxu0 0.0
    %188 = vmatpush1.msra.mxu0 %v149
    %189 = vmatprep.subr.mxu0 0.0
    %190 = vmatpush1.msra.mxu0 0.0
    %191 = vmatprep.subr.mxu0 0.0
    %192 = vmatpush1.msra.mxu0 0.0
    %193 = vmatprep.subr.mxu0 0.0
    %194 = vmatpush1.msra.mxu0 0.0
    %195 = vmatprep.subr.mxu0 0.0
    %196 = vmatpush1.msra.mxu0 0.0
    %197 = vmatprep.subr.mxu0 0.0
    %198 = vmatpush1.msra.mxu0 0.0
    %199 = vmatprep.subr.mxu0 0.0
    %200 = vmatpush1.msra.mxu0 0.0
    %201 = vmatprep.subr.mxu0 0.0
    %202 = vmatpush1.msra.mxu0 0.0
    %203 = vmatprep.subr.mxu0 0.0
    %204 = vmatpush1.msra.mxu0 0.0
    %205 = vmatprep.subr.mxu0 0.0
    %206 = vmatpush1.msra.mxu0 0.0
    %207 = vmatprep.subr.mxu0 0.0
    %208 = vmatpush1.msra.mxu0 0.0
    %209 = vmatprep.subr.mxu0 0.0
    %210 = vmatpush1.msra.mxu0 0.0
    %211 = vmatprep.subr.mxu0 0.0
    %212 = vmatpush1.msra.mxu0 0.0
    %213 = vmatprep.subr.mxu0 0.0
    %214 = vmatpush1.msra.mxu0 0.0
    %215 = vmatprep.subr.mxu0 0.0
    %216 = vmatpush1.msra.mxu0 0.0
    %217 = vmatprep.subr.mxu0 0.0
    %218 = vmatpush1.msra.mxu0 0.0
    %219 = vmatprep.subr.mxu0 0.0
    %220 = vmatpush1.msra.mxu0 0.0
    %221 = vmatprep.mubr.f32.mxu0 0.0
    %222 = vmatmul.mubr.f32.gmra.mrb[0].mxu0 %v133
    %v223 = vpop.f32.mrb[0].mxu0
    %v224 = vadd.f32 %v155, %v223
    %v225 = vpop.f32.mrb[0].mxu0
    %226 = vdwg.mxu0
    %v227 = vmax.f32 %v224, 0.0
    %v228 = vld [vmem:[#allocation6] sm:$0xff]
    %v229 = vld [vmem:[#allocation6 + $0x8] sm:$0xff]
    %v230 = vld [vmem:[#allocation6 + $0x10] sm:$0xff]
    %v231 = vld [vmem:[#allocation6 + $0x18] sm:$0xff]
    %v232 = vld [vmem:[#allocation6 + $0x20] sm:$0xff]
    %v233 = vld [vmem:[#allocation6 + $0x28] sm:$0xff]
    %v234 = vld [vmem:[#allocation6 + $0x30] sm:$0xff]
    %v235 = vld [vmem:[#allocation6 + $0x38] sm:$0xff]
    %v236 = vld [vmem:[#allocation6 + $0x40] sm:$0xff]
    %v237 = vld [vmem:[#allocation6 + $0x48] sm:$0xff]
    %v238 = vld [vmem:[#allocation6 + $0x50] sm:$0xff]
    %v239 = vld [vmem:[#allocation6 + $0x58] sm:$0xff]
    %v240 = vld [vmem:[#allocation6 + $0x60] sm:$0xff]
    %v241 = vld [vmem:[#allocation6 + $0x68] sm:$0xff]
    %v242 = vld [vmem:[#allocation6 + $0x70] sm:$0xff]
    %v243 = vld [vmem:[#allocation6 + $0x78] sm:$0xff]
    %v244 = vld [vmem:[#allocation7] sm:$0x1]
    %v246 = vlaneseq
    %v247 = vshrl.u32 %v246, 7
    %v248 = vsub.s32 0, %v247
    %v249 = vrot.slane %v244, %v248
    %251 = vmatprep.subr.mxu0 0.0
    %252 = vmatpush1.msra.mxu0 %v228
    %253 = vmatprep.subr.mxu0 0.0
    %254 = vmatpush1.msra.mxu0 %v229
    %255 = vmatprep.subr.mxu0 0.0
    %256 = vmatpush1.msra.mxu0 %v230
    %257 = vmatprep.subr.mxu0 0.0
    %258 = vmatpush1.msra.mxu0 %v231
    %259 = vmatprep.subr.mxu0 0.0
    %260 = vmatpush1.msra.mxu0 %v232
    %261 = vmatprep.subr.mxu0 0.0
    %262 = vmatpush1.msra.mxu0 %v233
    %263 = vmatprep.subr.mxu0 0.0
    %264 = vmatpush1.msra.mxu0 %v234
    %265 = vmatprep.subr.mxu0 0.0
    %266 = vmatpush1.msra.mxu0 %v235
    %267 = vmatprep.subr.mxu0 0.0
    %268 = vmatpush1.msra.mxu0 %v236
    %269 = vmatprep.subr.mxu0 0.0
    %270 = vmatpush1.msra.mxu0 %v237
    %271 = vmatprep.subr.mxu0 0.0
    %272 = vmatpush1.msra.mxu0 %v238
    %273 = vmatprep.subr.mxu0 0.0
    %274 = vmatpush1.msra.mxu0 %v239
    %275 = vmatprep.subr.mxu0 0.0
    %276 = vmatpush1.msra.mxu0 %v240
    %277 = vmatprep.subr.mxu0 0.0
    %278 = vmatpush1.msra.mxu0 %v241
    %279 = vmatprep.subr.mxu0 0.0
    %280 = vmatpush1.msra.mxu0 %v242
    %281 = vmatprep.subr.mxu0 0.0
    %282 = vmatpush1.msra.mxu0 %v243
    %283 = vmatprep.subr.mxu0 0.0
    %284 = vmatpush1.msra.mxu0 0.0
    %285 = vmatprep.subr.mxu0 0.0
    %286 = vmatpush1.msra.mxu0 0.0
    %287 = vmatprep.subr.mxu0 0.0
    %288 = vmatpush1.msra.mxu0 0.0
    %289 = vmatprep.subr.mxu0 0.0
    %290 = vmatpush1.msra.mxu0 0.0
    %291 = vmatprep.subr.mxu0 0.0
    %292 = vmatpush1.msra.mxu0 0.0
    %293 = vmatprep.subr.mxu0 0.0
    %294 = vmatpush1.msra.mxu0 0.0
    %295 = vmatprep.subr.mxu0 0.0
    %296 = vmatpush1.msra.mxu0 0.0
    %297 = vmatprep.subr.mxu0 0.0
    %298 = vmatpush1.msra.mxu0 0.0
    %299 = vmatprep.subr.mxu0 0.0
    %300 = vmatpush1.msra.mxu0 0.0
    %301 = vmatprep.subr.mxu0 0.0
    %302 = vmatpush1.msra.mxu0 0.0
    %303 = vmatprep.subr.mxu0 0.0
    %304 = vmatpush1.msra.mxu0 0.0
    %305 = vmatprep.subr.mxu0 0.0
    %306 = vmatpush1.msra.mxu0 0.0
    %307 = vmatprep.subr.mxu0 0.0
    %308 = vmatpush1.msra.mxu0 0.0
    %309 = vmatprep.subr.mxu0 0.0
    %310 = vmatpush1.msra.mxu0 0.0
    %311 = vmatprep.subr.mxu0 0.0
    %312 = vmatpush1.msra.mxu0 0.0
    %313 = vmatprep.subr.mxu0 0.0
    %314 = vmatpush1.msra.mxu0 0.0
    %315 = vmatprep.mubr.f32.mxu0 0.0
    %316 = vmatmul.mubr.f32.gmra.mrb[0].mxu0 %v227
    %v317 = vpop.f32.mrb[0].mxu0
    %v318 = vadd.f32 %v249, %v317
    %v319 = vpop.f32.mrb[0].mxu0
    %320 = vdwg.mxu0
    %v321 = vmax.f32 %v318, 0.0
    %v322 = vld [vmem:[#allocation9] sm:$0xff]
    %v323 = vld [vmem:[#allocation9 + $0x8] sm:$0xff]
    %v324 = vld [vmem:[#allocation9 + $0x10] sm:$0xff]
    %v325 = vld [vmem:[#allocation9 + $0x18] sm:$0xff]
    %v326 = vld [vmem:[#allocation9 + $0x20] sm:$0xff]
    %v327 = vld [vmem:[#allocation9 + $0x28] sm:$0xff]
    %v328 = vld [vmem:[#allocation9 + $0x30] sm:$0xff]
    %v329 = vld [vmem:[#allocation9 + $0x38] sm:$0xff]
    %v330 = vld [vmem:[#allocation9 + $0x40] sm:$0xff]
    %v331 = vld [vmem:[#allocation9 + $0x48] sm:$0xff]
    %v332 = vld [vmem:[#allocation9 + $0x50] sm:$0xff]
    %v333 = vld [vmem:[#allocation9 + $0x58] sm:$0xff]
    %v334 = vld [vmem:[#allocation9 + $0x60] sm:$0xff]
    %v335 = vld [vmem:[#allocation9 + $0x68] sm:$0xff]
    %v336 = vld [vmem:[#allocation9 + $0x70] sm:$0xff]
    %v337 = vld [vmem:[#allocation9 + $0x78] sm:$0xff]
    %v338 = vld [vmem:[#allocation10] sm:$0x1]
    %v340 = vlaneseq
    %v341 = vshrl.u32 %v340, 7
    %v342 = vsub.s32 0, %v341
    %v343 = vrot.slane %v338, %v342
    %345 = vmatprep.subr.mxu0 0.0
    %346 = vmatpush1.msra.mxu0 %v322
    %347 = vmatprep.subr.mxu0 0.0
    %348 = vmatpush1.msra.mxu0 %v323
    %349 = vmatprep.subr.mxu0 0.0
    %350 = vmatpush1.msra.mxu0 %v324
    %351 = vmatprep.subr.mxu0 0.0
    %352 = vmatpush1.msra.mxu0 %v325
    %353 = vmatprep.subr.mxu0 0.0
    %354 = vmatpush1.msra.mxu0 %v326
    %355 = vmatprep.subr.mxu0 0.0
    %356 = vmatpush1.msra.mxu0 %v327
    %357 = vmatprep.subr.mxu0 0.0
    %358 = vmatpush1.msra.mxu0 %v328
    %359 = vmatprep.subr.mxu0 0.0
    %360 = vmatpush1.msra.mxu0 %v329
    %361 = vmatprep.subr.mxu0 0.0
    %362 = vmatpush1.msra.mxu0 %v330
    %363 = vmatprep.subr.mxu0 0.0
    %364 = vmatpush1.msra.mxu0 %v331
    %365 = vmatprep.subr.mxu0 0.0
    %366 = vmatpush1.msra.mxu0 %v332
    %367 = vmatprep.subr.mxu0 0.0
    %368 = vmatpush1.msra.mxu0 %v333
    %369 = vmatprep.subr.mxu0 0.0
    %370 = vmatpush1.msra.mxu0 %v334
    %371 = vmatprep.subr.mxu0 0.0
    %372 = vmatpush1.msra.mxu0 %v335
    %373 = vmatprep.subr.mxu0 0.0
    %374 = vmatpush1.msra.mxu0 %v336
    %375 = vmatprep.subr.mxu0 0.0
    %376 = vmatpush1.msra.mxu0 %v337
    %377 = vmatprep.subr.mxu0 0.0
    %378 = vmatpush1.msra.mxu0 0.0
    %379 = vmatprep.subr.mxu0 0.0
    %380 = vmatpush1.msra.mxu0 0.0
    %381 = vmatprep.subr.mxu0 0.0
    %382 = vmatpush1.msra.mxu0 0.0
    %383 = vmatprep.subr.mxu0 0.0
    %384 = vmatpush1.msra.mxu0 0.0
    %385 = vmatprep.subr.mxu0 0.0
    %386 = vmatpush1.msra.mxu0 0.0
    %387 = vmatprep.subr.mxu0 0.0
    %388 = vmatpush1.msra.mxu0 0.0
    %389 = vmatprep.subr.mxu0 0.0
    %390 = vmatpush1.msra.mxu0 0.0
    %391 = vmatprep.subr.mxu0 0.0
    %392 = vmatpush1.msra.mxu0 0.0
    %393 = vmatprep.subr.mxu0 0.0
    %394 = vmatpush1.msra.mxu0 0.0
    %395 = vmatprep.subr.mxu0 0.0
    %396 = vmatpush1.msra.mxu0 0.0
    %397 = vmatprep.subr.mxu0 0.0
    %398 = vmatpush1.msra.mxu0 0.0
    %399 = vmatprep.subr.mxu0 0.0
    %400 = vmatpush1.msra.mxu0 0.0
    %401 = vmatprep.subr.mxu0 0.0
    %402 = vmatpush1.msra.mxu0 0.0
    %403 = vmatprep.subr.mxu0 0.0
    %404 = vmatpush1.msra.mxu0 0.0
    %405 = vmatprep.subr.mxu0 0.0
    %406 = vmatpush1.msra.mxu0 0.0
    %407 = vmatprep.subr.mxu0 0.0
    %408 = vmatpush1.msra.mxu0 0.0
    %409 = vmatprep.mubr.f32.mxu0 0.0
    %410 = vmatmul.mubr.f32.gmra.mrb[0].mxu0 %v321
    %v411 = vpop.f32.mrb[0].mxu0
    %v412 = vadd.f32 %v343, %v411
    %v413 = vpop.f32.mrb[0].mxu0
    %414 = vdwg.mxu0
    %v415 = vmax.f32 %v412, 0.0
    %v416 = vld [vmem:[#allocation12] sm:$0xff]
    %v417 = vld [vmem:[#allocation12 + $0x8] sm:$0xff]
    %v418 = vld [vmem:[#allocation12 + $0x10] sm:$0xff]
    %v419 = vld [vmem:[#allocation12 + $0x18] sm:$0xff]
    %v420 = vld [vmem:[#allocation12 + $0x20] sm:$0xff]
    %v421 = vld [vmem:[#allocation12 + $0x28] sm:$0xff]
    %v422 = vld [vmem:[#allocation12 + $0x30] sm:$0xff]
    %v423 = vld [vmem:[#allocation12 + $0x38] sm:$0xff]
    %v424 = vld [vmem:[#allocation12 + $0x40] sm:$0xff]
    %v425 = vld [vmem:[#allocation12 + $0x48] sm:$0xff]
    %v426 = vld [vmem:[#allocation12 + $0x50] sm:$0xff]
    %v427 = vld [vmem:[#allocation12 + $0x58] sm:$0xff]
    %v428 = vld [vmem:[#allocation12 + $0x60] sm:$0xff]
    %v429 = vld [vmem:[#allocation12 + $0x68] sm:$0xff]
    %v430 = vld [vmem:[#allocation12 + $0x70] sm:$0xff]
    %v431 = vld [vmem:[#allocation12 + $0x78] sm:$0xff]
    %v432 = vld [vmem:[#allocation12 + $0x80] sm:$0xff]
    %v433 = vld [vmem:[#allocation12 + $0x88] sm:$0xff]
    %v434 = vld [vmem:[#allocation12 + $0x90] sm:$0xff]
    %v435 = vld [vmem:[#allocation12 + $0x98] sm:$0xff]
    %v436 = vld [vmem:[#allocation12 + $0xa0] sm:$0xff]
    %v437 = vld [vmem:[#allocation12 + $0xa8] sm:$0xff]
    %v438 = vld [vmem:[#allocation12 + $0xb0] sm:$0xff]
    %v439 = vld [vmem:[#allocation12 + $0xb8] sm:$0xff]
    %v440 = vld [vmem:[#allocation12 + $0xc0] sm:$0xff]
    %v441 = vld [vmem:[#allocation12 + $0xc8] sm:$0xff]
    %v442 = vld [vmem:[#allocation12 + $0xd0] sm:$0xff]
    %v443 = vld [vmem:[#allocation12 + $0xd8] sm:$0xff]
    %v444 = vld [vmem:[#allocation12 + $0xe0] sm:$0xff]
    %v445 = vld [vmem:[#allocation12 + $0xe8] sm:$0xff]
    %v446 = vld [vmem:[#allocation12 + $0xf0] sm:$0xff]
    %v447 = vld [vmem:[#allocation12 + $0xf8] sm:$0xff]
    %v448 = vld [vmem:[#allocation12 + $0x100] sm:$0xff]
    %v449 = vld [vmem:[#allocation12 + $0x108] sm:$0xff]
    %v450 = vld [vmem:[#allocation12 + $0x110] sm:$0xff]
    %v451 = vld [vmem:[#allocation12 + $0x118] sm:$0xff]
    %v452 = vld [vmem:[#allocation12 + $0x120] sm:$0xff]
    %v453 = vld [vmem:[#allocation12 + $0x128] sm:$0xff]
    %v454 = vld [vmem:[#allocation12 + $0x130] sm:$0xff]
    %v455 = vld [vmem:[#allocation12 + $0x138] sm:$0xff]
    %v456 = vld [vmem:[#allocation12 + $0x140] sm:$0xff]
    %v457 = vld [vmem:[#allocation12 + $0x148] sm:$0xff]
    %v458 = vld [vmem:[#allocation12 + $0x150] sm:$0xff]
    %v459 = vld [vmem:[#allocation12 + $0x158] sm:$0xff]
    %v460 = vld [vmem:[#allocation12 + $0x160] sm:$0xff]
    %v461 = vld [vmem:[#allocation12 + $0x168] sm:$0xff]
    %v462 = vld [vmem:[#allocation12 + $0x170] sm:$0xff]
    %v463 = vld [vmem:[#allocation12 + $0x178] sm:$0xff]
    %v464 = vld [vmem:[#allocation12 + $0x180] sm:$0xff]
    %v465 = vld [vmem:[#allocation12 + $0x188] sm:$0xff]
    %v466 = vld [vmem:[#allocation12 + $0x190] sm:$0xff]
    %v467 = vld [vmem:[#allocation12 + $0x198] sm:$0xff]
    %v468 = vld [vmem:[#allocation12 + $0x1a0] sm:$0xff]
    %v469 = vld [vmem:[#allocation12 + $0x1a8] sm:$0xff]
    %v470 = vld [vmem:[#allocation12 + $0x1b0] sm:$0xff]
    %v471 = vld [vmem:[#allocation12 + $0x1b8] sm:$0xff]
    %v472 = vld [vmem:[#allocation12 + $0x1c0] sm:$0xff]
    %v473 = vld [vmem:[#allocation12 + $0x1c8] sm:$0xff]
    %v474 = vld [vmem:[#allocation12 + $0x1d0] sm:$0xff]
    %v475 = vld [vmem:[#allocation12 + $0x1d8] sm:$0xff]
    %v476 = vld [vmem:[#allocation12 + $0x1e0] sm:$0xff]
    %v477 = vld [vmem:[#allocation12 + $0x1e8] sm:$0xff]
    %v478 = vld [vmem:[#allocation12 + $0x1f0] sm:$0xff]
    %v479 = vld [vmem:[#allocation12 + $0x1f8] sm:$0xff]
    %v480 = vld [vmem:[#allocation13] sm:$0xf]
    %v482 = vlaneseq
    %v483 = vshrl.u32 %v482, 7
    %v484 = vsub.s32 0, %v483
    %v485 = vrot.slane %v480, %v484
    %v486 = vlaneseq
    %v487 = vshrl.u32 %v486, 7
    %v488 = vsub.s32 1, %v487
    %v489 = vrot.slane %v480, %v488
    %v490 = vlaneseq
    %v491 = vshrl.u32 %v490, 7
    %v492 = vsub.s32 2, %v491
    %v493 = vrot.slane %v480, %v492
    %v494 = vlaneseq
    %v495 = vshrl.u32 %v494, 7
    %v496 = vsub.s32 3, %v495
    %v497 = vrot.slane %v480, %v496
    %502 = vmatprep.subr.mxu0 %v417
    %503 = vmatpush1.msra.mxu0 %v416
    %504 = vmatprep.subr.mxu0 %v421
    %505 = vmatpush1.msra.mxu0 %v420
    %506 = vmatprep.subr.mxu0 %v425
    %507 = vmatpush1.msra.mxu0 %v424
    %508 = vmatprep.subr.mxu0 %v429
    %509 = vmatpush1.msra.mxu0 %v428
    %510 = vmatprep.subr.mxu0 %v433
    %511 = vmatpush1.msra.mxu0 %v432
    %512 = vmatprep.subr.mxu0 %v437
    %513 = vmatpush1.msra.mxu0 %v436
    %514 = vmatprep.subr.mxu0 %v441
    %515 = vmatpush1.msra.mxu0 %v440
    %516 = vmatprep.subr.mxu0 %v445
    %517 = vmatpush1.msra.mxu0 %v444
    %518 = vmatprep.subr.mxu0 %v449
    %519 = vmatpush1.msra.mxu0 %v448
    %520 = vmatprep.subr.mxu0 %v453
    %521 = vmatpush1.msra.mxu0 %v452
    %522 = vmatprep.subr.mxu0 %v457
    %523 = vmatpush1.msra.mxu0 %v456
    %524 = vmatprep.subr.mxu0 %v461
    %525 = vmatpush1.msra.mxu0 %v460
    %526 = vmatprep.subr.mxu0 %v465
    %527 = vmatpush1.msra.mxu0 %v464
    %528 = vmatprep.subr.mxu0 %v469
    %529 = vmatpush1.msra.mxu0 %v468
    %530 = vmatprep.subr.mxu0 %v473
    %531 = vmatpush1.msra.mxu0 %v472
    %532 = vmatprep.subr.mxu0 %v477
    %533 = vmatpush1.msra.mxu0 %v476
    %534 = vmatprep.subr.mxu0 0.0
    %535 = vmatpush1.msra.mxu0 0.0
    %536 = vmatprep.subr.mxu0 0.0
    %537 = vmatpush1.msra.mxu0 0.0
    %538 = vmatprep.subr.mxu0 0.0
    %539 = vmatpush1.msra.mxu0 0.0
    %540 = vmatprep.subr.mxu0 0.0
    %541 = vmatpush1.msra.mxu0 0.0
    %542 = vmatprep.subr.mxu0 0.0
    %543 = vmatpush1.msra.mxu0 0.0
    %544 = vmatprep.subr.mxu0 0.0
    %545 = vmatpush1.msra.mxu0 0.0
    %546 = vmatprep.subr.mxu0 0.0
    %547 = vmatpush1.msra.mxu0 0.0
    %548 = vmatprep.subr.mxu0 0.0
    %549 = vmatpush1.msra.mxu0 0.0
    %550 = vmatprep.subr.mxu0 0.0
    %551 = vmatpush1.msra.mxu0 0.0
    %552 = vmatprep.subr.mxu0 0.0
    %553 = vmatpush1.msra.mxu0 0.0
    %554 = vmatprep.subr.mxu0 0.0
    %555 = vmatpush1.msra.mxu0 0.0
    %556 = vmatprep.subr.mxu0 0.0
    %557 = vmatpush1.msra.mxu0 0.0
    %558 = vmatprep.subr.mxu0 0.0
    %559 = vmatpush1.msra.mxu0 0.0
    %560 = vmatprep.subr.mxu0 0.0
    %561 = vmatpush1.msra.mxu0 0.0
    %562 = vmatprep.subr.mxu0 0.0
    %563 = vmatpush1.msra.mxu0 0.0
    %564 = vmatprep.subr.mxu0 0.0
    %565 = vmatpush1.msra.mxu0 0.0
    %566 = vmatprep.mubr.f32.mxu0 0.0
    %567 = vmatmul.mubr.f32.gmra.mrb[0].mxu0 %v415
    %v568 = vpop.f32.mrb[0].mxu0
    %v569 = vadd.f32 %v485, %v568
    %v570 = vpop.f32.mrb[0].mxu0
    %v571 = vadd.f32 %v489, %v570
    %572 = vdwg.mxu0
    %573 = vmatprep.subr.mxu0 %v419
    %574 = vmatpush1.msra.mxu0 %v418
    %575 = vmatprep.subr.mxu0 %v423
    %576 = vmatpush1.msra.mxu0 %v422
    %577 = vmatprep.subr.mxu0 %v427
    %578 = vmatpush1.msra.mxu0 %v426
    %579 = vmatprep.subr.mxu0 %v431
    %580 = vmatpush1.msra.mxu0 %v430
    %581 = vmatprep.subr.mxu0 %v435
    %582 = vmatpush1.msra.mxu0 %v434
    %583 = vmatprep.subr.mxu0 %v439
    %584 = vmatpush1.msra.mxu0 %v438
    %585 = vmatprep.subr.mxu0 %v443
    %586 = vmatpush1.msra.mxu0 %v442
    %587 = vmatprep.subr.mxu0 %v447
    %588 = vmatpush1.msra.mxu0 %v446
    %589 = vmatprep.subr.mxu0 %v451
    %590 = vmatpush1.msra.mxu0 %v450
    %591 = vmatprep.subr.mxu0 %v455
    %592 = vmatpush1.msra.mxu0 %v454
    %593 = vmatprep.subr.mxu0 %v459
    %594 = vmatpush1.msra.mxu0 %v458
    %595 = vmatprep.subr.mxu0 %v463
    %596 = vmatpush1.msra.mxu0 %v462
    %597 = vmatprep.subr.mxu0 %v467
    %598 = vmatpush1.msra.mxu0 %v466
    %599 = vmatprep.subr.mxu0 %v471
    %600 = vmatpush1.msra.mxu0 %v470
    %601 = vmatprep.subr.mxu0 %v475
    %602 = vmatpush1.msra.mxu0 %v474
    %603 = vmatprep.subr.mxu0 %v479
    %604 = vmatpush1.msra.mxu0 %v478
    %605 = vmatprep.subr.mxu0 0.0
    %606 = vmatpush1.msra.mxu0 0.0
    %607 = vmatprep.subr.mxu0 0.0
    %608 = vmatpush1.msra.mxu0 0.0
    %609 = vmatprep.subr.mxu0 0.0
    %610 = vmatpush1.msra.mxu0 0.0
    %611 = vmatprep.subr.mxu0 0.0
    %612 = vmatpush1.msra.mxu0 0.0
    %613 = vmatprep.subr.mxu0 0.0
    %614 = vmatpush1.msra.mxu0 0.0
    %615 = vmatprep.subr.mxu0 0.0
    %616 = vmatpush1.msra.mxu0 0.0
    %617 = vmatprep.subr.mxu0 0.0
    %618 = vmatpush1.msra.mxu0 0.0
    %619 = vmatprep.subr.mxu0 0.0
    %620 = vmatpush1.msra.mxu0 0.0
    %621 = vmatprep.subr.mxu0 0.0
    %622 = vmatpush1.msra.mxu0 0.0
    %623 = vmatprep.subr.mxu0 0.0
    %624 = vmatpush1.msra.mxu0 0.0
    %625 = vmatprep.subr.mxu0 0.0
    %626 = vmatpush1.msra.mxu0 0.0
    %627 = vmatprep.subr.mxu0 0.0
    %628 = vmatpush1.msra.mxu0 0.0
    %629 = vmatprep.subr.mxu0 0.0
    %630 = vmatpush1.msra.mxu0 0.0
    %631 = vmatprep.subr.mxu0 0.0
    %632 = vmatpush1.msra.mxu0 0.0
    %633 = vmatprep.subr.mxu0 0.0
    %634 = vmatpush1.msra.mxu0 0.0
    %635 = vmatprep.subr.mxu0 0.0
    %636 = vmatpush1.msra.mxu0 0.0
    %637 = vmatprep.mubr.f32.mxu0 0.0
    %638 = vmatmul.mubr.f32.gmra.mrb[0].mxu0 %v415
    %v639 = vpop.f32.mrb[0].mxu0
    %v640 = vadd.f32 %v493, %v639
    %v641 = vpop.f32.mrb[0].mxu0
    %v642 = vadd.f32 %v497, %v641
    %643 = vdwg.mxu0
    %644 = vst [vmem:[%s9] sm:$0xff] %v569
    %645 = vst [vmem:[%s9 + $0x8] sm:$0xff] %v571
    %646 = vst [vmem:[%s9 + $0x10] sm:$0xff] %v640
    %647 = vst [vmem:[%s9 + $0x18] sm:$0xff] %v642
    // Predicated region
    $region70: #{_lambda_.2} parent=1 // pred_check
      _
    $region71: #{_lambda_.2} parent=1 // pred_check_branch
      %649 = sbr.rel (0) target = $region73
    $region72: #{_lambda_.2} parent=1 // pred_region
      _
    $region73: #{_lambda_.2} parent=1 // pred_fallthru
      _
    // Predicated region
    $region74: #{_lambda_.2} parent=1 // pred_check
      _
    $region75: #{_lambda_.2} parent=1 // pred_check_branch
      %651 = sbr.rel (0) target = $region77
    $region76: #{_lambda_.2} parent=1 // pred_region
      _
    $region77: #{_lambda_.2} parent=1 // pred_fallthru
      _
    %652 = vsyncpa [#allocation3], 1
    %653 = vsyncpa [#allocation5], 1
    %654 = vsyncpa [#allocation8], 1
    %655 = vsyncpa [#allocation11], 1
    %656 = vsyncpa [#allocation14], 1

// kernel: _lambda_.3
$region0: #{_lambda_.3}
  #allocation0 [shape = 'u32[]', space=smem, size = 0x4, offset = 0x4, fixed_abs, tag = 'smem constant byte address 0x4 - core index']
  #allocation1 [shape = 'u32[144,128]{1,0:T(1,128)}', space=vmem, size = 0x12000, scoped, tag = 'internal scratch']
  %s0 = inlined_call_operand.vmem [shape: f32[256,256], index: 0, kind: input, shape index: {}]
  %s1 = inlined_call_operand.vmem [shape: f32[2,4,256,256], index: 1, kind: input, shape index: {}]
  %s2 = inlined_call_operand.hbm [shape: f32[2,256,256], index: 2, kind: output, shape index: {}]
  %s3 = sld [smem:[#allocation0]]
  $region41: #{_lambda_.3} parent=0
    _
  %s5 = ssub.s32 1, %s3
  %s6 = scalar_select 0, %s5, %s3
  $region1: #{_lambda_.3} parent=0
    #allocation2 [shape = 'u8[524288]{0}', space=vmem, size = 0x80000, scoped, tag = 'output window, operand 0']
    #allocation3 [shape = 's32[2]{0}', space=sflag, size = 0x8, scoped, tag = 'scoped memory for _lambda_.3']
    %7 = vsyncpa [#allocation3], 0
    %s8 = scalar_lea.sflag [#allocation3], 1
    %9 = vsyncpa %s8, 0
    loop: start=0, step=1, limit=4
    $region2: #{_lambda_.3} parent=1 // loop_pre_header
      _
    $region3: #{_lambda_.3} parent=1 // loop_header
      %s11 = sphi 0, %s15
      %p12 = scmp.ge.s32.totalorder %s11, 4
      %s18 = sphi 0, %s30
      %s19 = sphi 0, %s26
      %s20 = sphi 0, %s18
      %s21 = sphi 0, %s19
      %s22 = sphi 0, %s20
      %s23 = sphi 0, %s21
      %s33 = sphi 0, %s35
      %s36 = sphi 0, %s33
      %s37 = sphi 0, %s36
      %s53 = sphi 0, %s37
      %s61 = sphi 0, %s63
      %s64 = sphi 0, %s61
      %s65 = sphi 0, %s64
      %s81 = sphi 0, %s65
      %s89 = sphi 0, %s91
      %s92 = sphi 0, %s89
      %s93 = sphi 0, %s92
      %s109 = sphi 0, %s93
    $region4: #{_lambda_.3} parent=1 // loop_header_branch
      %14 = sbr.rel (%p12) target = $region8
    $region5: #{_lambda_.3} parent=1 // loop_body
      %s16 = ssub.s32 %s11, 1
      %s17 = ssub.s32 %s11, 2
      %s24 = sadd.s32 1, %s19
      %p25 = scmp.ge.s32.totalorder %s24, 2
      %s26 = scalar_select %p25, 0, %s24
      %s27 = sadd.s32 1, %s18
      %s28 = scalar_select %p25, %s27, %s18
      %p29 = scmp.ge.s32.totalorder %s28, 1
      %s30 = scalar_select %p29, 0, %s28
      %s31 = ssub.s32 %s18, %s30
      %p32 = scmp.eq.s32.totalorder %s31, 0
      %s34 = sadd.s32 %s33, 1
      %s35 = scalar_select %p32, %s33, %s34
      %p38 = pneg %p32
      %p39 = scmp.eq.s32.totalorder %s11, 1
      %p40 = por %p38, %p39
      %p41 = scmp.ne.s32.totalorder %s33, %s36
      %p42 = scmp.eq.s32.totalorder %s11, 0
      %p43 = por %p41, %p42
      %p44 = scmp.ne.s32.totalorder %s33, %s36
      %p45 = scmp.eq.s32.totalorder %s16, 1
      %p46 = por %p44, %p45
      %p47 = scmp.ne.s32.totalorder %s36, %s37
      %p48 = scmp.eq.s32.totalorder %s16, 0
      %p49 = por %p47, %p48
      %p50 = scmp.ne.s32.totalorder %s36, %s37
      %p51 = scmp.eq.s32.totalorder %s17, 1
      %p52 = por %p50, %p51
      %p54 = scmp.ne.s32.totalorder %s37, %s53
      %p55 = scmp.eq.s32.totalorder %s17, 0
      %p56 = por %p54, %p55
      %s57 = ssub.s32 %s19, %s26
      %s58 = ssub.s32 %s18, %s30
      %s59 = sor.u32 %s57, %s58
      %p60 = scmp.eq.s32.totalorder %s59, 0
      %s62 = sadd.s32 %s61, 1
      %s63 = scalar_select %p60, %s61, %s62
      %p66 = pneg %p60
      %p67 = scmp.eq.s32.totalorder %s11, 1
      %p68 = por %p66, %p67
      %p69 = scmp.ne.s32.totalorder %s61, %s64
      %p70 = scmp.eq.s32.totalorder %s11, 0
      %p71 = por %p69, %p70
      %p72 = scmp.ne.s32.totalorder %s61, %s64
      %p73 = scmp.eq.s32.totalorder %s16, 1
      %p74 = por %p72, %p73
      %p75 = scmp.ne.s32.totalorder %s64, %s65
      %p76 = scmp.eq.s32.totalorder %s16, 0
      %p77 = por %p75, %p76
      %p78 = scmp.ne.s32.totalorder %s64, %s65
      %p79 = scmp.eq.s32.totalorder %s17, 1
      %p80 = por %p78, %p79
      %p82 = scmp.ne.s32.totalorder %s65, %s81
      %p83 = scmp.eq.s32.totalorder %s17, 0
      %p84 = por %p82, %p83
      %s85 = ssub.s32 %s19, %s26
      %s86 = ssub.s32 %s18, %s30
      %s87 = sor.u32 %s85, %s86
      %p88 = scmp.eq.s32.totalorder %s87, 0
      %s90 = sadd.s32 %s89, 1
      %s91 = scalar_select %p88, %s89, %s90
      %p94 = pneg %p88
      %p95 = scmp.eq.s32.totalorder %s11, 1
      %p96 = por %p94, %p95
      %p97 = scmp.ne.s32.totalorder %s89, %s92
      %p98 = scmp.eq.s32.totalorder %s11, 0
      %p99 = por %p97, %p98
      %p100 = scmp.ne.s32.totalorder %s89, %s92
      %p101 = scmp.eq.s32.totalorder %s16, 1
      %p102 = por %p100, %p101
      %p103 = scmp.ne.s32.totalorder %s92, %s93
      %p104 = scmp.eq.s32.totalorder %s16, 0
      %p105 = por %p103, %p104
      %p106 = scmp.ne.s32.totalorder %s92, %s93
      %p107 = scmp.eq.s32.totalorder %s17, 1
      %p108 = por %p106, %p107
      %p110 = scmp.ne.s32.totalorder %s93, %s109
      %p111 = scmp.eq.s32.totalorder %s17, 0
      %p112 = por %p110, %p111
      %p113 = scmp.le.s32.totalorder 1, %s11
      %p114 = scmp.lt.s32.totalorder %s11, 3
      %p115 = pnand %p113, %p114
      %p116 = pneg %p115
      // Predicated region
      $region9: #{_lambda_.3} parent=5 // pred_check
        _
      $region10: #{_lambda_.3} parent=5 // pred_check_branch
        %118 = sbr.rel (%p115) target = $region12
      $region11: #{_lambda_.3} parent=5 // pred_region
        %s119 = ssub.s32 %s11, 1
        // Predicated region
        $region13: #{_lambda_.3} parent=11 // pred_check
          %p120 = pneg %p49
        $region14: #{_lambda_.3} parent=11 // pred_check_branch
          %122 = sbr.rel (%p120) target = $region16
        $region15: #{_lambda_.3} parent=11 // pred_region
          %s123 = smul.u32 32, %s20
          %p124 = scmp.lt.s32.totalorder %s123, 31
          %s125 = scalar_select %p124, %s123, 31
          %s126 = smul.addr %s125, 2
          %s127 = smul.addr %s126, 8
          %s128 = scalar_lea.vmem %s0, %s127
          %s129 = smul.u32 32, %s20
        $region16: #{_lambda_.3} parent=11 // pred_fallthru
          _
      $region12: #{_lambda_.3} parent=5 // pred_fallthru
        _
      %p130 = scmp.lt.s32.totalorder %s11, 2
      // Predicated region
      $region17: #{_lambda_.3} parent=5 // pred_check
        %p131 = pneg %p130
      $region18: #{_lambda_.3} parent=5 // pred_check_branch
        %133 = sbr.rel (%p131) target = $region20
      $region19: #{_lambda_.3} parent=5 // pred_region
        // Predicated region
        $region21: #{_lambda_.3} parent=19 // pred_check
          %p134 = pneg %p71
        $region22: #{_lambda_.3} parent=19 // pred_check_branch
          %136 = sbr.rel (%p134) target = $region24
        $region23: #{_lambda_.3} parent=19 // pred_region
          %s137 = smul.u32 32, %s18
          %p138 = scmp.lt.s32.totalorder %s19, 1
          %s139 = scalar_select %p138, %s19, 1
          %p140 = scmp.lt.s32.totalorder %s137, 31
          %s141 = scalar_select %p140, %s137, 31
          %s142 = smul.addr %s141, 2
          %s143 = smul.addr %s139, 256
          %s144 = sadd.s32 %s142, %s143
          %s145 = smul.addr %s144, 8
          %s146 = scalar_lea.vmem %s1, %s145
          %s147 = smul.u32 32, %s18
        $region24: #{_lambda_.3} parent=19 // pred_fallthru
          _
      $region20: #{_lambda_.3} parent=5 // pred_fallthru
        _
      %p148 = scmp.le.s32.totalorder 1, %s11
      %p149 = scmp.lt.s32.totalorder %s11, 3
      %p150 = pnand %p148, %p149
      %p151 = pneg %p150
      // Predicated region
      $region25: #{_lambda_.3} parent=5 // pred_check
        _
      $region26: #{_lambda_.3} parent=5 // pred_check_branch
        %153 = sbr.rel (%p150) target = $region28
      $region27: #{_lambda_.3} parent=5 // pred_region
        %s154 = ssub.s32 %s11, 1
        %s155 = smul.u32 32, %s20
        %p156 = scmp.lt.s32.totalorder %s155, 31
        %s157 = scalar_select %p156, %s155, 31
        %s158 = smul.addr %s157, 2
        %s159 = smul.addr %s158, 8
        %s160 = scalar_lea.vmem %s0, %s159
        %p161 = pneg %p49
        %p162 = pneg %p46
        %s163 = smul.u32 32, %s20
        %p164 = scmp.lt.s32.totalorder %s21, 1
        %s165 = scalar_select %p164, %s21, 1
        %p166 = scmp.lt.s32.totalorder %s163, 31
        %s167 = scalar_select %p166, %s163, 31
        %s168 = smul.addr %s167, 2
        %s169 = smul.addr %s165, 256
        %s170 = sadd.s32 %s168, %s169
        %s171 = smul.addr %s170, 8
        %s172 = scalar_lea.vmem %s1, %s171
        %p173 = pneg %p77
        %p174 = pneg %p74
        %p175 = pneg %p105
        %p176 = pneg %p102
        %s177 = sand.u32 %s92, 1
        %s178 = scalar_lea.sflag [#allocation3], %s177
        %s179 = sand.u32 %s92, 1
        %s180 = smul.addr %s179, 512
        %s181 = scalar_lea.vmem [#allocation2], %s180
        %s182 = smul.u32 32, %s20
        %p183 = scmp.lt.s32.totalorder %s182, 31
        %s184 = scalar_select %p183, %s182, 31
        %s185 = smul.addr %s184, 2
        %s186 = smul.addr %s185, 8
        %s187 = scalar_lea.vmem %s0, %s186
        %s188 = smul.u32 32, %s20
        %s189 = smul.u32 32, %s20
        %p190 = scmp.lt.s32.totalorder %s21, 1
        %s191 = scalar_select %p190, %s21, 1
        %p192 = scmp.lt.s32.totalorder %s189, 31
        %s193 = scalar_select %p192, %s189, 31
        %s194 = smul.addr %s193, 2
        %s195 = smul.addr %s191, 256
        %s196 = sadd.s32 %s194, %s195
        %s197 = smul.addr %s196, 8
        %s198 = scalar_lea.vmem %s1, %s197
        %s199 = smul.u32 32, %s20
        %s200 = smul.u32 32, %s20
        %v201 = vld [vmem:[%s187] sm:$0xff]
        %v202 = vld [vmem:[%s187 + $0x8] sm:$0xff]
        %v203 = vld [vmem:[%s187 + $0x10] sm:$0xff]
        %v204 = vld [vmem:[%s187 + $0x18] sm:$0xff]
        %v205 = vld [vmem:[%s187 + $0x20] sm:$0xff]
        %v206 = vld [vmem:[%s187 + $0x28] sm:$0xff]
        %v207 = vld [vmem:[%s187 + $0x30] sm:$0xff]
        %v208 = vld [vmem:[%s187 + $0x38] sm:$0xff]
        %v209 = vld [vmem:[%s187 + $0x40] sm:$0xff]
        %v210 = vld [vmem:[%s187 + $0x48] sm:$0xff]
        %v211 = vld [vmem:[%s187 + $0x50] sm:$0xff]
        %v212 = vld [vmem:[%s187 + $0x58] sm:$0xff]
        %v213 = vld [vmem:[%s187 + $0x60] sm:$0xff]
        %v214 = vld [vmem:[%s187 + $0x68] sm:$0xff]
        %v215 = vld [vmem:[%s187 + $0x70] sm:$0xff]
        %v216 = vld [vmem:[%s187 + $0x78] sm:$0xff]
        %v217 = vld [vmem:[%s187 + $0x80] sm:$0xff]
        %v218 = vld [vmem:[%s187 + $0x88] sm:$0xff]
        %v219 = vld [vmem:[%s187 + $0x90] sm:$0xff]
        %v220 = vld [vmem:[%s187 + $0x98] sm:$0xff]
        %v221 = vld [vmem:[%s187 + $0xa0] sm:$0xff]
        %v222 = vld [vmem:[%s187 + $0xa8] sm:$0xff]
        %v223 = vld [vmem:[%s187 + $0xb0] sm:$0xff]
        %v224 = vld [vmem:[%s187 + $0xb8] sm:$0xff]
        %v225 = vld [vmem:[%s187 + $0xc0] sm:$0xff]
        %v226 = vld [vmem:[%s187 + $0xc8] sm:$0xff]
        %v227 = vld [vmem:[%s187 + $0xd0] sm:$0xff]
        %v228 = vld [vmem:[%s187 + $0xd8] sm:$0xff]
        %v229 = vld [vmem:[%s187 + $0xe0] sm:$0xff]
        %v230 = vld [vmem:[%s187 + $0xe8] sm:$0xff]
        %v231 = vld [vmem:[%s187 + $0xf0] sm:$0xff]
        %v232 = vld [vmem:[%s187 + $0xf8] sm:$0xff]
        %v233 = vld [vmem:[%s187 + $0x100] sm:$0xff]
        %v234 = vld [vmem:[%s187 + $0x108] sm:$0xff]
        %v235 = vld [vmem:[%s187 + $0x110] sm:$0xff]
        %v236 = vld [vmem:[%s187 + $0x118] sm:$0xff]
        %v237 = vld [vmem:[%s187 + $0x120] sm:$0xff]
        %v238 = vld [vmem:[%s187 + $0x128] sm:$0xff]
        %v239 = vld [vmem:[%s187 + $0x130] sm:$0xff]
        %v240 = vld [vmem:[%s187 + $0x138] sm:$0xff]
        %v241 = vld [vmem:[%s187 + $0x140] sm:$0xff]
        %v242 = vld [vmem:[%s187 + $0x148] sm:$0xff]
        %v243 = vld [vmem:[%s187 + $0x150] sm:$0xff]
        %v244 = vld [vmem:[%s187 + $0x158] sm:$0xff]
        %v245 = vld [vmem:[%s187 + $0x160] sm:$0xff]
        %v246 = vld [vmem:[%s187 + $0x168] sm:$0xff]
        %v247 = vld [vmem:[%s187 + $0x170] sm:$0xff]
        %v248 = vld [vmem:[%s187 + $0x178] sm:$0xff]
        %v249 = vld [vmem:[%s187 + $0x180] sm:$0xff]
        %v250 = vld [vmem:[%s187 + $0x188] sm:$0xff]
        %v251 = vld [vmem:[%s187 + $0x190] sm:$0xff]
        %v252 = vld [vmem:[%s187 + $0x198] sm:$0xff]
        %v253 = vld [vmem:[%s187 + $0x1a0] sm:$0xff]
        %v254 = vld [vmem:[%s187 + $0x1a8] sm:$0xff]
        %v255 = vld [vmem:[%s187 + $0x1b0] sm:$0xff]
        %v256 = vld [vmem:[%s187 + $0x1b8] sm:$0xff]
        %v257 = vld [vmem:[%s187 + $0x1c0] sm:$0xff]
        %v258 = vld [vmem:[%s187 + $0x1c8] sm:$0xff]
        %v259 = vld [vmem:[%s187 + $0x1d0] sm:$0xff]
        %v260 = vld [vmem:[%s187 + $0x1d8] sm:$0xff]
        %v261 = vld [vmem:[%s187 + $0x1e0] sm:$0xff]
        %v262 = vld [vmem:[%s187 + $0x1e8] sm:$0xff]
        %v263 = vld [vmem:[%s187 + $0x1f0] sm:$0xff]
        %v264 = vld [vmem:[%s187 + $0x1f8] sm:$0xff]
        %v265 = vld [vmem:[%s198] sm:$0xff]
        %v266 = vld [vmem:[%s198 + $0x8] sm:$0xff]
        %v267 = vld [vmem:[%s198 + $0x10] sm:$0xff]
        %v268 = vld [vmem:[%s198 + $0x18] sm:$0xff]
        %v269 = vld [vmem:[%s198 + $0x20] sm:$0xff]
        %v270 = vld [vmem:[%s198 + $0x28] sm:$0xff]
        %v271 = vld [vmem:[%s198 + $0x30] sm:$0xff]
        %v272 = vld [vmem:[%s198 + $0x38] sm:$0xff]
        %v273 = vld [vmem:[%s198 + $0x40] sm:$0xff]
        %v274 = vld [vmem:[%s198 + $0x48] sm:$0xff]
        %v275 = vld [vmem:[%s198 + $0x50] sm:$0xff]
        %v276 = vld [vmem:[%s198 + $0x58] sm:$0xff]
        %v277 = vld [vmem:[%s198 + $0x60] sm:$0xff]
        %v278 = vld [vmem:[%s198 + $0x68] sm:$0xff]
        %v279 = vld [vmem:[%s198 + $0x70] sm:$0xff]
        %v280 = vld [vmem:[%s198 + $0x78] sm:$0xff]
        %v281 = vld [vmem:[%s198 + $0x80] sm:$0xff]
        %v282 = vld [vmem:[%s198 + $0x88] sm:$0xff]
        %v283 = vld [vmem:[%s198 + $0x90] sm:$0xff]
        %v284 = vld [vmem:[%s198 + $0x98] sm:$0xff]
        %v285 = vld [vmem:[%s198 + $0xa0] sm:$0xff]
        %v286 = vld [vmem:[%s198 + $0xa8] sm:$0xff]
        %v287 = vld [vmem:[%s198 + $0xb0] sm:$0xff]
        %v288 = vld [vmem:[%s198 + $0xb8] sm:$0xff]
        %v289 = vld [vmem:[%s198 + $0xc0] sm:$0xff]
        %v290 = vld [vmem:[%s198 + $0xc8] sm:$0xff]
        %v291 = vld [vmem:[%s198 + $0xd0] sm:$0xff]
        %v292 = vld [vmem:[%s198 + $0xd8] sm:$0xff]
        %v293 = vld [vmem:[%s198 + $0xe0] sm:$0xff]
        %v294 = vld [vmem:[%s198 + $0xe8] sm:$0xff]
        %v295 = vld [vmem:[%s198 + $0xf0] sm:$0xff]
        %v296 = vld [vmem:[%s198 + $0xf8] sm:$0xff]
        %v297 = vld [vmem:[%s198 + $0x100] sm:$0xff]
        %v298 = vld [vmem:[%s198 + $0x108] sm:$0xff]
        %v299 = vld [vmem:[%s198 + $0x110] sm:$0xff]
        %v300 = vld [vmem:[%s198 + $0x118] sm:$0xff]
        %v301 = vld [vmem:[%s198 + $0x120] sm:$0xff]
        %v302 = vld [vmem:[%s198 + $0x128] sm:$0xff]
        %v303 = vld [vmem:[%s198 + $0x130] sm:$0xff]
        %v304 = vld [vmem:[%s198 + $0x138] sm:$0xff]
        %v305 = vld [vmem:[%s198 + $0x140] sm:$0xff]
        %v306 = vld [vmem:[%s198 + $0x148] sm:$0xff]
        %v307 = vld [vmem:[%s198 + $0x150] sm:$0xff]
        %v308 = vld [vmem:[%s198 + $0x158] sm:$0xff]
        %v309 = vld [vmem:[%s198 + $0x160] sm:$0xff]
        %v310 = vld [vmem:[%s198 + $0x168] sm:$0xff]
        %v311 = vld [vmem:[%s198 + $0x170] sm:$0xff]
        %v312 = vld [vmem:[%s198 + $0x178] sm:$0xff]
        %v313 = vld [vmem:[%s198 + $0x180] sm:$0xff]
        %v314 = vld [vmem:[%s198 + $0x188] sm:$0xff]
        %v315 = vld [vmem:[%s198 + $0x190] sm:$0xff]
        %v316 = vld [vmem:[%s198 + $0x198] sm:$0xff]
        %v317 = vld [vmem:[%s198 + $0x1a0] sm:$0xff]
        %v318 = vld [vmem:[%s198 + $0x1a8] sm:$0xff]
        %v319 = vld [vmem:[%s198 + $0x1b0] sm:$0xff]
        %v320 = vld [vmem:[%s198 + $0x1b8] sm:$0xff]
        %v321 = vld [vmem:[%s198 + $0x1c0] sm:$0xff]
        %v322 = vld [vmem:[%s198 + $0x1c8] sm:$0xff]
        %v323 = vld [vmem:[%s198 + $0x1d0] sm:$0xff]
        %v324 = vld [vmem:[%s198 + $0x1d8] sm:$0xff]
        %v325 = vld [vmem:[%s198 + $0x1e0] sm:$0xff]
        %v326 = vld [vmem:[%s198 + $0x1e8] sm:$0xff]
        %v327 = vld [vmem:[%s198 + $0x1f0] sm:$0xff]
        %v328 = vld [vmem:[%s198 + $0x1f8] sm:$0xff]
        %s329 = scalar_lea.vmem %s198, 512
        %v330 = vld [vmem:[%s329] sm:$0xff]
        %v331 = vld [vmem:[%s329 + $0x8] sm:$0xff]
        %v332 = vld [vmem:[%s329 + $0x10] sm:$0xff]
        %v333 = vld [vmem:[%s329 + $0x18] sm:$0xff]
        %v334 = vld [vmem:[%s329 + $0x20] sm:$0xff]
        %v335 = vld [vmem:[%s329 + $0x28] sm:$0xff]
        %v336 = vld [vmem:[%s329 + $0x30] sm:$0xff]
        %v337 = vld [vmem:[%s329 + $0x38] sm:$0xff]
        %v338 = vld [vmem:[%s329 + $0x40] sm:$0xff]
        %v339 = vld [vmem:[%s329 + $0x48] sm:$0xff]
        %v340 = vld [vmem:[%s329 + $0x50] sm:$0xff]
        %v341 = vld [vmem:[%s329 + $0x58] sm:$0xff]
        %v342 = vld [vmem:[%s329 + $0x60] sm:$0xff]
        %v343 = vld [vmem:[%s329 + $0x68] sm:$0xff]
        %v344 = vld [vmem:[%s329 + $0x70] sm:$0xff]
        %v345 = vld [vmem:[%s329 + $0x78] sm:$0xff]
        %v346 = vld [vmem:[%s329 + $0x80] sm:$0xff]
        %v347 = vld [vmem:[%s329 + $0x88] sm:$0xff]
        %v348 = vld [vmem:[%s329 + $0x90] sm:$0xff]
        %v349 = vld [vmem:[%s329 + $0x98] sm:$0xff]
        %v350 = vld [vmem:[%s329 + $0xa0] sm:$0xff]
        %v351 = vld [vmem:[%s329 + $0xa8] sm:$0xff]
        %v352 = vld [vmem:[%s329 + $0xb0] sm:$0xff]
        %v353 = vld [vmem:[%s329 + $0xb8] sm:$0xff]
        %v354 = vld [vmem:[%s329 + $0xc0] sm:$0xff]
        %v355 = vld [vmem:[%s329 + $0xc8] sm:$0xff]
        %v356 = vld [vmem:[%s329 + $0xd0] sm:$0xff]
        %v357 = vld [vmem:[%s329 + $0xd8] sm:$0xff]
        %v358 = vld [vmem:[%s329 + $0xe0] sm:$0xff]
        %v359 = vld [vmem:[%s329 + $0xe8] sm:$0xff]
        %v360 = vld [vmem:[%s329 + $0xf0] sm:$0xff]
        %v361 = vld [vmem:[%s329 + $0xf8] sm:$0xff]
        %v362 = vld [vmem:[%s329 + $0x100] sm:$0xff]
        %v363 = vld [vmem:[%s329 + $0x108] sm:$0xff]
        %v364 = vld [vmem:[%s329 + $0x110] sm:$0xff]
        %v365 = vld [vmem:[%s329 + $0x118] sm:$0xff]
        %v366 = vld [vmem:[%s329 + $0x120] sm:$0xff]
        %v367 = vld [vmem:[%s329 + $0x128] sm:$0xff]
        %v368 = vld [vmem:[%s329 + $0x130] sm:$0xff]
        %v369 = vld [vmem:[%s329 + $0x138] sm:$0xff]
        %v370 = vld [vmem:[%s329 + $0x140] sm:$0xff]
        %v371 = vld [vmem:[%s329 + $0x148] sm:$0xff]
        %v372 = vld [vmem:[%s329 + $0x150] sm:$0xff]
        %v373 = vld [vmem:[%s329 + $0x158] sm:$0xff]
        %v374 = vld [vmem:[%s329 + $0x160] sm:$0xff]
        %v375 = vld [vmem:[%s329 + $0x168] sm:$0xff]
        %v376 = vld [vmem:[%s329 + $0x170] sm:$0xff]
        %v377 = vld [vmem:[%s329 + $0x178] sm:$0xff]
        %v378 = vld [vmem:[%s329 + $0x180] sm:$0xff]
        %v379 = vld [vmem:[%s329 + $0x188] sm:$0xff]
        %v380 = vld [vmem:[%s329 + $0x190] sm:$0xff]
        %v381 = vld [vmem:[%s329 + $0x198] sm:$0xff]
        %v382 = vld [vmem:[%s329 + $0x1a0] sm:$0xff]
        %v383 = vld [vmem:[%s329 + $0x1a8] sm:$0xff]
        %v384 = vld [vmem:[%s329 + $0x1b0] sm:$0xff]
        %v385 = vld [vmem:[%s329 + $0x1b8] sm:$0xff]
        %v386 = vld [vmem:[%s329 + $0x1c0] sm:$0xff]
        %v387 = vld [vmem:[%s329 + $0x1c8] sm:$0xff]
        %v388 = vld [vmem:[%s329 + $0x1d0] sm:$0xff]
        %v389 = vld [vmem:[%s329 + $0x1d8] sm:$0xff]
        %v390 = vld [vmem:[%s329 + $0x1e0] sm:$0xff]
        %v391 = vld [vmem:[%s329 + $0x1e8] sm:$0xff]
        %v392 = vld [vmem:[%s329 + $0x1f0] sm:$0xff]
        %v393 = vld [vmem:[%s329 + $0x1f8] sm:$0xff]
        %s394 = scalar_lea.vmem %s198, 1024
        %v395 = vld [vmem:[%s394] sm:$0xff]
        %v396 = vld [vmem:[%s394 + $0x8] sm:$0xff]
        %v397 = vld [vmem:[%s394 + $0x10] sm:$0xff]
        %v398 = vld [vmem:[%s394 + $0x18] sm:$0xff]
        %v399 = vld [vmem:[%s394 + $0x20] sm:$0xff]
        %v400 = vld [vmem:[%s394 + $0x28] sm:$0xff]
        %v401 = vld [vmem:[%s394 + $0x30] sm:$0xff]
        %v402 = vld [vmem:[%s394 + $0x38] sm:$0xff]
        %v403 = vld [vmem:[%s394 + $0x40] sm:$0xff]
        %v404 = vld [vmem:[%s394 + $0x48] sm:$0xff]
        %v405 = vld [vmem:[%s394 + $0x50] sm:$0xff]
        %v406 = vld [vmem:[%s394 + $0x58] sm:$0xff]
        %v407 = vld [vmem:[%s394 + $0x60] sm:$0xff]
        %v408 = vld [vmem:[%s394 + $0x68] sm:$0xff]
        %v409 = vld [vmem:[%s394 + $0x70] sm:$0xff]
        %v410 = vld [vmem:[%s394 + $0x78] sm:$0xff]
        %v411 = vld [vmem:[%s394 + $0x80] sm:$0xff]
        %v412 = vld [vmem:[%s394 + $0x88] sm:$0xff]
        %v413 = vld [vmem:[%s394 + $0x90] sm:$0xff]
        %v414 = vld [vmem:[%s394 + $0x98] sm:$0xff]
        %v415 = vld [vmem:[%s394 + $0xa0] sm:$0xff]
        %v416 = vld [vmem:[%s394 + $0xa8] sm:$0xff]
        %v417 = vld [vmem:[%s394 + $0xb0] sm:$0xff]
        %v418 = vld [vmem:[%s394 + $0xb8] sm:$0xff]
        %v419 = vld [vmem:[%s394 + $0xc0] sm:$0xff]
        %v420 = vld [vmem:[%s394 + $0xc8] sm:$0xff]
        %v421 = vld [vmem:[%s394 + $0xd0] sm:$0xff]
        %v422 = vld [vmem:[%s394 + $0xd8] sm:$0xff]
        %v423 = vld [vmem:[%s394 + $0xe0] sm:$0xff]
        %v424 = vld [vmem:[%s394 + $0xe8] sm:$0xff]
        %v425 = vld [vmem:[%s394 + $0xf0] sm:$0xff]
        %v426 = vld [vmem:[%s394 + $0xf8] sm:$0xff]
        %v427 = vld [vmem:[%s394 + $0x100] sm:$0xff]
        %v428 = vld [vmem:[%s394 + $0x108] sm:$0xff]
        %v429 = vld [vmem:[%s394 + $0x110] sm:$0xff]
        %v430 = vld [vmem:[%s394 + $0x118] sm:$0xff]
        %v431 = vld [vmem:[%s394 + $0x120] sm:$0xff]
        %v432 = vld [vmem:[%s394 + $0x128] sm:$0xff]
        %v433 = vld [vmem:[%s394 + $0x130] sm:$0xff]
        %v434 = vld [vmem:[%s394 + $0x138] sm:$0xff]
        %v435 = vld [vmem:[%s394 + $0x140] sm:$0xff]
        %v436 = vld [vmem:[%s394 + $0x148] sm:$0xff]
        %v437 = vld [vmem:[%s394 + $0x150] sm:$0xff]
        %v438 = vld [vmem:[%s394 + $0x158] sm:$0xff]
        %v439 = vld [vmem:[%s394 + $0x160] sm:$0xff]
        %v440 = vld [vmem:[%s394 + $0x168] sm:$0xff]
        %v441 = vld [vmem:[%s394 + $0x170] sm:$0xff]
        %v442 = vld [vmem:[%s394 + $0x178] sm:$0xff]
        %v443 = vld [vmem:[%s394 + $0x180] sm:$0xff]
        %v444 = vld [vmem:[%s394 + $0x188] sm:$0xff]
        %v445 = vld [vmem:[%s394 + $0x190] sm:$0xff]
        %v446 = vld [vmem:[%s394 + $0x198] sm:$0xff]
        %v447 = vld [vmem:[%s394 + $0x1a0] sm:$0xff]
        %v448 = vld [vmem:[%s394 + $0x1a8] sm:$0xff]
        %v449 = vld [vmem:[%s394 + $0x1b0] sm:$0xff]
        %v450 = vld [vmem:[%s394 + $0x1b8] sm:$0xff]
        %v451 = vld [vmem:[%s394 + $0x1c0] sm:$0xff]
        %v452 = vld [vmem:[%s394 + $0x1c8] sm:$0xff]
        %v453 = vld [vmem:[%s394 + $0x1d0] sm:$0xff]
        %v454 = vld [vmem:[%s394 + $0x1d8] sm:$0xff]
        %v455 = vld [vmem:[%s394 + $0x1e0] sm:$0xff]
        %v456 = vld [vmem:[%s394 + $0x1e8] sm:$0xff]
        %v457 = vld [vmem:[%s394 + $0x1f0] sm:$0xff]
        %v458 = vld [vmem:[%s394 + $0x1f8] sm:$0xff]
        %s459 = scalar_lea.vmem %s198, 1536
        %v460 = vld [vmem:[%s459] sm:$0xff]
        %v461 = vld [vmem:[%s459 + $0x8] sm:$0xff]
        %v462 = vld [vmem:[%s459 + $0x10] sm:$0xff]
        %v463 = vld [vmem:[%s459 + $0x18] sm:$0xff]
        %v464 = vld [vmem:[%s459 + $0x20] sm:$0xff]
        %v465 = vld [vmem:[%s459 + $0x28] sm:$0xff]
        %v466 = vld [vmem:[%s459 + $0x30] sm:$0xff]
        %v467 = vld [vmem:[%s459 + $0x38] sm:$0xff]
        %v468 = vld [vmem:[%s459 + $0x40] sm:$0xff]
        %v469 = vld [vmem:[%s459 + $0x48] sm:$0xff]
        %v470 = vld [vmem:[%s459 + $0x50] sm:$0xff]
        %v471 = vld [vmem:[%s459 + $0x58] sm:$0xff]
        %v472 = vld [vmem:[%s459 + $0x60] sm:$0xff]
        %v473 = vld [vmem:[%s459 + $0x68] sm:$0xff]
        %v474 = vld [vmem:[%s459 + $0x70] sm:$0xff]
        %v475 = vld [vmem:[%s459 + $0x78] sm:$0xff]
        %v476 = vld [vmem:[%s459 + $0x80] sm:$0xff]
        %v477 = vld [vmem:[%s459 + $0x88] sm:$0xff]
        %v478 = vld [vmem:[%s459 + $0x90] sm:$0xff]
        %v479 = vld [vmem:[%s459 + $0x98] sm:$0xff]
        %v480 = vld [vmem:[%s459 + $0xa0] sm:$0xff]
        %v481 = vld [vmem:[%s459 + $0xa8] sm:$0xff]
        %v482 = vld [vmem:[%s459 + $0xb0] sm:$0xff]
        %v483 = vld [vmem:[%s459 + $0xb8] sm:$0xff]
        %v484 = vld [vmem:[%s459 + $0xc0] sm:$0xff]
        %v485 = vld [vmem:[%s459 + $0xc8] sm:$0xff]
        %v486 = vld [vmem:[%s459 + $0xd0] sm:$0xff]
        %v487 = vld [vmem:[%s459 + $0xd8] sm:$0xff]
        %v488 = vld [vmem:[%s459 + $0xe0] sm:$0xff]
        %v489 = vld [vmem:[%s459 + $0xe8] sm:$0xff]
        %v490 = vld [vmem:[%s459 + $0xf0] sm:$0xff]
        %v491 = vld [vmem:[%s459 + $0xf8] sm:$0xff]
        %v492 = vld [vmem:[%s459 + $0x100] sm:$0xff]
        %v493 = vld [vmem:[%s459 + $0x108] sm:$0xff]
        %v494 = vld [vmem:[%s459 + $0x110] sm:$0xff]
        %v495 = vld [vmem:[%s459 + $0x118] sm:$0xff]
        %v496 = vld [vmem:[%s459 + $0x120] sm:$0xff]
        %v497 = vld [vmem:[%s459 + $0x128] sm:$0xff]
        %v498 = vld [vmem:[%s459 + $0x130] sm:$0xff]
        %v499 = vld [vmem:[%s459 + $0x138] sm:$0xff]
        %v500 = vld [vmem:[%s459 + $0x140] sm:$0xff]
        %v501 = vld [vmem:[%s459 + $0x148] sm:$0xff]
        %v502 = vld [vmem:[%s459 + $0x150] sm:$0xff]
        %v503 = vld [vmem:[%s459 + $0x158] sm:$0xff]
        %v504 = vld [vmem:[%s459 + $0x160] sm:$0xff]
        %v505 = vld [vmem:[%s459 + $0x168] sm:$0xff]
        %v506 = vld [vmem:[%s459 + $0x170] sm:$0xff]
        %v507 = vld [vmem:[%s459 + $0x178] sm:$0xff]
        %v508 = vld [vmem:[%s459 + $0x180] sm:$0xff]
        %v509 = vld [vmem:[%s459 + $0x188] sm:$0xff]
        %v510 = vld [vmem:[%s459 + $0x190] sm:$0xff]
        %v511 = vld [vmem:[%s459 + $0x198] sm:$0xff]
        %v512 = vld [vmem:[%s459 + $0x1a0] sm:$0xff]
        %v513 = vld [vmem:[%s459 + $0x1a8] sm:$0xff]
        %v514 = vld [vmem:[%s459 + $0x1b0] sm:$0xff]
        %v515 = vld [vmem:[%s459 + $0x1b8] sm:$0xff]
        %v516 = vld [vmem:[%s459 + $0x1c0] sm:$0xff]
        %v517 = vld [vmem:[%s459 + $0x1c8] sm:$0xff]
        %v518 = vld [vmem:[%s459 + $0x1d0] sm:$0xff]
        %v519 = vld [vmem:[%s459 + $0x1d8] sm:$0xff]
        %v520 = vld [vmem:[%s459 + $0x1e0] sm:$0xff]
        %v521 = vld [vmem:[%s459 + $0x1e8] sm:$0xff]
        %v522 = vld [vmem:[%s459 + $0x1f0] sm:$0xff]
        %v523 = vld [vmem:[%s459 + $0x1f8] sm:$0xff]
        %v524 = vmul.f32 %v201, %v460
        %v525 = vmul.f32 %v202, %v461
        %v526 = vmul.f32 %v203, %v462
        %v527 = vmul.f32 %v204, %v463
        %v528 = vmul.f32 %v205, %v464
        %v529 = vmul.f32 %v206, %v465
        %v530 = vmul.f32 %v207, %v466
        %v531 = vmul.f32 %v208, %v467
        %v532 = vmul.f32 %v209, %v468
        %v533 = vmul.f32 %v210, %v469
        %v534 = vmul.f32 %v211, %v470
        %v535 = vmul.f32 %v212, %v471
        %v536 = vmul.f32 %v213, %v472
        %v537 = vmul.f32 %v214, %v473
        %v538 = vmul.f32 %v215, %v474
        %v539 = vmul.f32 %v216, %v475
        %v540 = vmul.f32 %v217, %v476
        %v541 = vmul.f32 %v218, %v477
        %v542 = vmul.f32 %v219, %v478
        %v543 = vmul.f32 %v220, %v479
        %v544 = vmul.f32 %v221, %v480
        %v545 = vmul.f32 %v222, %v481
        %v546 = vmul.f32 %v223, %v482
        %v547 = vmul.f32 %v224, %v483
        %v548 = vmul.f32 %v225, %v484
        %v549 = vmul.f32 %v226, %v485
        %v550 = vmul.f32 %v227, %v486
        %v551 = vmul.f32 %v228, %v487
        %v552 = vmul.f32 %v229, %v488
        %v553 = vmul.f32 %v230, %v489
        %v554 = vmul.f32 %v231, %v490
        %v555 = vmul.f32 %v232, %v491
        %v556 = vmul.f32 %v233, %v492
        %v557 = vmul.f32 %v234, %v493
        %v558 = vmul.f32 %v235, %v494
        %v559 = vmul.f32 %v236, %v495
        %v560 = vmul.f32 %v237, %v496
        %v561 = vmul.f32 %v238, %v497
        %v562 = vmul.f32 %v239, %v498
        %v563 = vmul.f32 %v240, %v499
        %v564 = vmul.f32 %v241, %v500
        %v565 = vmul.f32 %v242, %v501
        %v566 = vmul.f32 %v243, %v502
        %v567 = vmul.f32 %v244, %v503
        %v568 = vmul.f32 %v245, %v504
        %v569 = vmul.f32 %v246, %v505
        %v570 = vmul.f32 %v247, %v506
        %v571 = vmul.f32 %v248, %v507
        %v572 = vmul.f32 %v249, %v508
        %v573 = vmul.f32 %v250, %v509
        %v574 = vmul.f32 %v251, %v510
        %v575 = vmul.f32 %v252, %v511
        %v576 = vmul.f32 %v253, %v512
        %v577 = vmul.f32 %v254, %v513
        %v578 = vmul.f32 %v255, %v514
        %v579 = vmul.f32 %v256, %v515
        %v580 = vmul.f32 %v257, %v516
        %v581 = vmul.f32 %v258, %v517
        %v582 = vmul.f32 %v259, %v518
        %v583 = vmul.f32 %v260, %v519
        %v584 = vmul.f32 %v261, %v520
        %v585 = vmul.f32 %v262, %v521
        %v586 = vmul.f32 %v263, %v522
        %v587 = vmul.f32 %v264, %v523
        %v588 = vadd.f32 %v395, %v524
        %v589 = vadd.f32 %v396, %v525
        %v590 = vadd.f32 %v397, %v526
        %v591 = vadd.f32 %v398, %v527
        %v592 = vadd.f32 %v399, %v528
        %v593 = vadd.f32 %v400, %v529
        %v594 = vadd.f32 %v401, %v530
        %v595 = vadd.f32 %v402, %v531
        %v596 = vadd.f32 %v403, %v532
        %v597 = vadd.f32 %v404, %v533
        %v598 = vadd.f32 %v405, %v534
        %v599 = vadd.f32 %v406, %v535
        %v600 = vadd.f32 %v407, %v536
        %v601 = vadd.f32 %v408, %v537
        %v602 = vadd.f32 %v409, %v538
        %v603 = vadd.f32 %v410, %v539
        %v604 = vadd.f32 %v411, %v540
        %v605 = vadd.f32 %v412, %v541
        %v606 = vadd.f32 %v413, %v542
        %v607 = vadd.f32 %v414, %v543
        %v608 = vadd.f32 %v415, %v544
        %v609 = vadd.f32 %v416, %v545
        %v610 = vadd.f32 %v417, %v546
        %v611 = vadd.f32 %v418, %v547
        %v612 = vadd.f32 %v419, %v548
        %v613 = vadd.f32 %v420, %v549
        %v614 = vadd.f32 %v421, %v550
        %v615 = vadd.f32 %v422, %v551
        %v616 = vadd.f32 %v423, %v552
        %v617 = vadd.f32 %v424, %v553
        %v618 = vadd.f32 %v425, %v554
        %v619 = vadd.f32 %v426, %v555
        %v620 = vadd.f32 %v427, %v556
        %v621 = vadd.f32 %v428, %v557
        %v622 = vadd.f32 %v429, %v558
        %v623 = vadd.f32 %v430, %v559
        %v624 = vadd.f32 %v431, %v560
        %v625 = vadd.f32 %v432, %v561
        %v626 = vadd.f32 %v433, %v562
        %v627 = vadd.f32 %v434, %v563
        %v628 = vadd.f32 %v435, %v564
        %v629 = vadd.f32 %v436, %v565
        %v630 = vadd.f32 %v437, %v566
        %v631 = vadd.f32 %v438, %v567
        %v632 = vadd.f32 %v439, %v568
        %v633 = vadd.f32 %v440, %v569
        %v634 = vadd.f32 %v441, %v570
        %v635 = vadd.f32 %v442, %v571
        %v636 = vadd.f32 %v443, %v572
        %v637 = vadd.f32 %v444, %v573
        %v638 = vadd.f32 %v445, %v574
        %v639 = vadd.f32 %v446, %v575
        %v640 = vadd.f32 %v447, %v576
        %v641 = vadd.f32 %v448, %v577
        %v642 = vadd.f32 %v449, %v578
        %v643 = vadd.f32 %v450, %v579
        %v644 = vadd.f32 %v451, %v580
        %v645 = vadd.f32 %v452, %v581
        %v646 = vadd.f32 %v453, %v582
        %v647 = vadd.f32 %v454, %v583
        %v648 = vadd.f32 %v455, %v584
        %v649 = vadd.f32 %v456, %v585
        %v650 = vadd.f32 %v457, %v586
        %v651 = vadd.f32 %v458, %v587
        %v652 = vmul.f32 %v201, %v588
        %v653 = vmul.f32 %v202, %v589
        %v654 = vmul.f32 %v203, %v590
        %v655 = vmul.f32 %v204, %v591
        %v656 = vmul.f32 %v205, %v592
        %v657 = vmul.f32 %v206, %v593
        %v658 = vmul.f32 %v207, %v594
        %v659 = vmul.f32 %v208, %v595
        %v660 = vmul.f32 %v209, %v596
        %v661 = vmul.f32 %v210, %v597
        %v662 = vmul.f32 %v211, %v598
        %v663 = vmul.f32 %v212, %v599
        %v664 = vmul.f32 %v213, %v600
        %v665 = vmul.f32 %v214, %v601
        %v666 = vmul.f32 %v215, %v602
        %v667 = vmul.f32 %v216, %v603
        %v668 = vmul.f32 %v217, %v604
        %v669 = vmul.f32 %v218, %v605
        %v670 = vmul.f32 %v219, %v606
        %v671 = vmul.f32 %v220, %v607
        %v672 = vmul.f32 %v221, %v608
        %v673 = vmul.f32 %v222, %v609
        %v674 = vmul.f32 %v223, %v610
        %v675 = vmul.f32 %v224, %v611
        %v676 = vmul.f32 %v225, %v612
        %v677 = vmul.f32 %v226, %v613
        %v678 = vmul.f32 %v227, %v614
        %v679 = vmul.f32 %v228, %v615
        %v680 = vmul.f32 %v229, %v616
        %v681 = vmul.f32 %v230, %v617
        %v682 = vmul.f32 %v231, %v618
        %v683 = vmul.f32 %v232, %v619
        %v684 = vmul.f32 %v233, %v620
        %v685 = vmul.f32 %v234, %v621
        %v686 = vmul.f32 %v235, %v622
        %v687 = vmul.f32 %v236, %v623
        %v688 = vmul.f32 %v237, %v624
        %v689 = vmul.f32 %v238, %v625
        %v690 = vmul.f32 %v239, %v626
        %v691 = vmul.f32 %v240, %v627
        %v692 = vmul.f32 %v241, %v628
        %v693 = vmul.f32 %v242, %v629
        %v694 = vmul.f32 %v243, %v630
        %v695 = vmul.f32 %v244, %v631
        %v696 = vmul.f32 %v245, %v632
        %v697 = vmul.f32 %v246, %v633
        %v698 = vmul.f32 %v247, %v634
        %v699 = vmul.f32 %v248, %v635
        %v700 = vmul.f32 %v249, %v636
        %v701 = vmul.f32 %v250, %v637
        %v702 = vmul.f32 %v251, %v638
        %v703 = vmul.f32 %v252, %v639
        %v704 = vmul.f32 %v253, %v640
        %v705 = vmul.f32 %v254, %v641
        %v706 = vmul.f32 %v255, %v642
        %v707 = vmul.f32 %v256, %v643
        %v708 = vmul.f32 %v257, %v644
        %v709 = vmul.f32 %v258, %v645
        %v710 = vmul.f32 %v259, %v646
        %v711 = vmul.f32 %v260, %v647
        %v712 = vmul.f32 %v261, %v648
        %v713 = vmul.f32 %v262, %v649
        %v714 = vmul.f32 %v263, %v650
        %v715 = vmul.f32 %v264, %v651
        %v716 = vadd.f32 %v330, %v652
        %v717 = vadd.f32 %v331, %v653
        %v718 = vadd.f32 %v332, %v654
        %v719 = vadd.f32 %v333, %v655
        %v720 = vadd.f32 %v334, %v656
        %v721 = vadd.f32 %v335, %v657
        %v722 = vadd.f32 %v336, %v658
        %v723 = vadd.f32 %v337, %v659
        %v724 = vadd.f32 %v338, %v660
        %v725 = vadd.f32 %v339, %v661
        %v726 = vadd.f32 %v340, %v662
        %v727 = vadd.f32 %v341, %v663
        %v728 = vadd.f32 %v342, %v664
        %v729 = vadd.f32 %v343, %v665
        %v730 = vadd.f32 %v344, %v666
        %v731 = vadd.f32 %v345, %v667
        %v732 = vadd.f32 %v346, %v668
        %v733 = vadd.f32 %v347, %v669
        %v734 = vadd.f32 %v348, %v670
        %v735 = vadd.f32 %v349, %v671
        %v736 = vadd.f32 %v350, %v672
        %v737 = vadd.f32 %v351, %v673
        %v738 = vadd.f32 %v352, %v674
        %v739 = vadd.f32 %v353, %v675
        %v740 = vadd.f32 %v354, %v676
        %v741 = vadd.f32 %v355, %v677
        %v742 = vadd.f32 %v356, %v678
        %v743 = vadd.f32 %v357, %v679
        %v744 = vadd.f32 %v358, %v680
        %v745 = vadd.f32 %v359, %v681
        %v746 = vadd.f32 %v360, %v682
        %v747 = vadd.f32 %v361, %v683
        %v748 = vadd.f32 %v362, %v684
        %v749 = vadd.f32 %v363, %v685
        %v750 = vadd.f32 %v364, %v686
        %v751 = vadd.f32 %v365, %v687
        %v752 = vadd.f32 %v366, %v688
        %v753 = vadd.f32 %v367, %v689
        %v754 = vadd.f32 %v368, %v690
        %v755 = vadd.f32 %v369, %v691
        %v756 = vadd.f32 %v370, %v692
        %v757 = vadd.f32 %v371, %v693
        %v758 = vadd.f32 %v372, %v694
        %v759 = vadd.f32 %v373, %v695
        %v760 = vadd.f32 %v374, %v696
        %v761 = vadd.f32 %v375, %v697
        %v762 = vadd.f32 %v376, %v698
        %v763 = vadd.f32 %v377, %v699
        %v764 = vadd.f32 %v378, %v700
        %v765 = vadd.f32 %v379, %v701
        %v766 = vadd.f32 %v380, %v702
        %v767 = vadd.f32 %v381, %v703
        %v768 = vadd.f32 %v382, %v704
        %v769 = vadd.f32 %v383, %v705
        %v770 = vadd.f32 %v384, %v706
        %v771 = vadd.f32 %v385, %v707
        %v772 = vadd.f32 %v386, %v708
        %v773 = vadd.f32 %v387, %v709
        %v774 = vadd.f32 %v388, %v710
        %v775 = vadd.f32 %v389, %v711
        %v776 = vadd.f32 %v390, %v712
        %v777 = vadd.f32 %v391, %v713
        %v778 = vadd.f32 %v392, %v714
        %v779 = vadd.f32 %v393, %v715
        %v780 = vmul.f32 %v201, %v716
        %v781 = vmul.f32 %v202, %v717
        %v782 = vmul.f32 %v203, %v718
        %v783 = vmul.f32 %v204, %v719
        %v784 = vmul.f32 %v205, %v720
        %v785 = vmul.f32 %v206, %v721
        %v786 = vmul.f32 %v207, %v722
        %v787 = vmul.f32 %v208, %v723
        %v788 = vmul.f32 %v209, %v724
        %v789 = vmul.f32 %v210, %v725
        %v790 = vmul.f32 %v211, %v726
        %v791 = vmul.f32 %v212, %v727
        %v792 = vmul.f32 %v213, %v728
        %v793 = vmul.f32 %v214, %v729
        %v794 = vmul.f32 %v215, %v730
        %v795 = vmul.f32 %v216, %v731
        %v796 = vmul.f32 %v217, %v732
        %v797 = vmul.f32 %v218, %v733
        %v798 = vmul.f32 %v219, %v734
        %v799 = vmul.f32 %v220, %v735
        %v800 = vmul.f32 %v221, %v736
        %v801 = vmul.f32 %v222, %v737
        %v802 = vmul.f32 %v223, %v738
        %v803 = vmul.f32 %v224, %v739
        %v804 = vmul.f32 %v225, %v740
        %v805 = vmul.f32 %v226, %v741
        %v806 = vmul.f32 %v227, %v742
        %v807 = vmul.f32 %v228, %v743
        %v808 = vmul.f32 %v229, %v744
        %v809 = vmul.f32 %v230, %v745
        %v810 = vmul.f32 %v231, %v746
        %v811 = vmul.f32 %v232, %v747
        %v812 = vmul.f32 %v233, %v748
        %v813 = vmul.f32 %v234, %v749
        %v814 = vmul.f32 %v235, %v750
        %v815 = vmul.f32 %v236, %v751
        %v816 = vmul.f32 %v237, %v752
        %v817 = vmul.f32 %v238, %v753
        %v818 = vmul.f32 %v239, %v754
        %v819 = vmul.f32 %v240, %v755
        %v820 = vmul.f32 %v241, %v756
        %v821 = vmul.f32 %v242, %v757
        %v822 = vmul.f32 %v243, %v758
        %v823 = vmul.f32 %v244, %v759
        %v824 = vmul.f32 %v245, %v760
        %v825 = vmul.f32 %v246, %v761
        %v826 = vmul.f32 %v247, %v762
        %v827 = vmul.f32 %v248, %v763
        %v828 = vmul.f32 %v249, %v764
        %v829 = vmul.f32 %v250, %v765
        %v830 = vmul.f32 %v251, %v766
        %v831 = vmul.f32 %v252, %v767
        %v832 = vmul.f32 %v253, %v768
        %v833 = vmul.f32 %v254, %v769
        %v834 = vmul.f32 %v255, %v770
        %v835 = vmul.f32 %v256, %v771
        %v836 = vmul.f32 %v257, %v772
        %v837 = vmul.f32 %v258, %v773
        %v838 = vmul.f32 %v259, %v774
        %v839 = vmul.f32 %v260, %v775
        %v840 = vmul.f32 %v261, %v776
        %v841 = vmul.f32 %v262, %v777
        %v842 = vmul.f32 %v263, %v778
        %v843 = vmul.f32 %v264, %v779
        %v844 = vadd.f32 %v265, %v780
        %v845 = vadd.f32 %v266, %v781
        %v846 = vadd.f32 %v267, %v782
        %v847 = vadd.f32 %v268, %v783
        %v848 = vadd.f32 %v269, %v784
        %v849 = vadd.f32 %v270, %v785
        %v850 = vadd.f32 %v271, %v786
        %v851 = vadd.f32 %v272, %v787
        %v852 = vadd.f32 %v273, %v788
        %v853 = vadd.f32 %v274, %v789
        %v854 = vadd.f32 %v275, %v790
        %v855 = vadd.f32 %v276, %v791
        %v856 = vadd.f32 %v277, %v792
        %v857 = vadd.f32 %v278, %v793
        %v858 = vadd.f32 %v279, %v794
        %v859 = vadd.f32 %v280, %v795
        %v860 = vadd.f32 %v281, %v796
        %v861 = vadd.f32 %v282, %v797
        %v862 = vadd.f32 %v283, %v798
        %v863 = vadd.f32 %v284, %v799
        %v864 = vadd.f32 %v285, %v800
        %v865 = vadd.f32 %v286, %v801
        %v866 = vadd.f32 %v287, %v802
        %v867 = vadd.f32 %v288, %v803
        %v868 = vadd.f32 %v289, %v804
        %v869 = vadd.f32 %v290, %v805
        %v870 = vadd.f32 %v291, %v806
        %v871 = vadd.f32 %v292, %v807
        %v872 = vadd.f32 %v293, %v808
        %v873 = vadd.f32 %v294, %v809
        %v874 = vadd.f32 %v295, %v810
        %v875 = vadd.f32 %v296, %v811
        %v876 = vadd.f32 %v297, %v812
        %v877 = vadd.f32 %v298, %v813
        %v878 = vadd.f32 %v299, %v814
        %v879 = vadd.f32 %v300, %v815
        %v880 = vadd.f32 %v301, %v816
        %v881 = vadd.f32 %v302, %v817
        %v882 = vadd.f32 %v303, %v818
        %v883 = vadd.f32 %v304, %v819
        %v884 = vadd.f32 %v305, %v820
        %v885 = vadd.f32 %v306, %v821
        %v886 = vadd.f32 %v307, %v822
        %v887 = vadd.f32 %v308, %v823
        %v888 = vadd.f32 %v309, %v824
        %v889 = vadd.f32 %v310, %v825
        %v890 = vadd.f32 %v311, %v826
        %v891 = vadd.f32 %v312, %v827
        %v892 = vadd.f32 %v313, %v828
        %v893 = vadd.f32 %v314, %v829
        %v894 = vadd.f32 %v315, %v830
        %v895 = vadd.f32 %v316, %v831
        %v896 = vadd.f32 %v317, %v832
        %v897 = vadd.f32 %v318, %v833
        %v898 = vadd.f32 %v319, %v834
        %v899 = vadd.f32 %v320, %v835
        %v900 = vadd.f32 %v321, %v836
        %v901 = vadd.f32 %v322, %v837
        %v902 = vadd.f32 %v323, %v838
        %v903 = vadd.f32 %v324, %v839
        %v904 = vadd.f32 %v325, %v840
        %v905 = vadd.f32 %v326, %v841
        %v906 = vadd.f32 %v327, %v842
        %v907 = vadd.f32 %v328, %v843
        %v908 = vsub.f32 %v844, 9.446281
        %v909 = vsub.f32 %v845, 9.446281
        %v910 = vsub.f32 %v846, 9.446281
        %v911 = vsub.f32 %v847, 9.446281
        %v912 = vsub.f32 %v848, 9.446281
        %v913 = vsub.f32 %v849, 9.446281
        %v914 = vsub.f32 %v850, 9.446281
        %v915 = vsub.f32 %v851, 9.446281
        %v916 = vsub.f32 %v852, 9.446281
        %v917 = vsub.f32 %v853, 9.446281
        %v918 = vsub.f32 %v854, 9.446281
        %v919 = vsub.f32 %v855, 9.446281
        %v920 = vsub.f32 %v856, 9.446281
        %v921 = vsub.f32 %v857, 9.446281
        %v922 = vsub.f32 %v858, 9.446281
        %v923 = vsub.f32 %v859, 9.446281
        %v924 = vsub.f32 %v860, 9.446281
        %v925 = vsub.f32 %v861, 9.446281
        %v926 = vsub.f32 %v862, 9.446281
        %v927 = vsub.f32 %v863, 9.446281
        %v928 = vsub.f32 %v864, 9.446281
        %v929 = vsub.f32 %v865, 9.446281
        %v930 = vsub.f32 %v866, 9.446281
        %v931 = vsub.f32 %v867, 9.446281
        %v932 = vsub.f32 %v868, 9.446281
        %v933 = vsub.f32 %v869, 9.446281
        %v934 = vsub.f32 %v870, 9.446281
        %v935 = vsub.f32 %v871, 9.446281
        %v936 = vsub.f32 %v872, 9.446281
        %v937 = vsub.f32 %v873, 9.446281
        %v938 = vsub.f32 %v874, 9.446281
        %v939 = vsub.f32 %v875, 9.446281
        %v940 = vsub.f32 %v876, 9.446281
        %v941 = vsub.f32 %v877, 9.446281
        %v942 = vsub.f32 %v878, 9.446281
        %v943 = vsub.f32 %v879, 9.446281
        %v944 = vsub.f32 %v880, 9.446281
        %v945 = vsub.f32 %v881, 9.446281
        %v946 = vsub.f32 %v882, 9.446281
        %v947 = vsub.f32 %v883, 9.446281
        %v948 = vsub.f32 %v884, 9.446281
        %v949 = vsub.f32 %v885, 9.446281
        %v950 = vsub.f32 %v886, 9.446281
        %v951 = vsub.f32 %v887, 9.446281
        %v952 = vsub.f32 %v888, 9.446281
        %v953 = vsub.f32 %v889, 9.446281
        %v954 = vsub.f32 %v890, 9.446281
        %v955 = vsub.f32 %v891, 9.446281
        %v956 = vsub.f32 %v892, 9.446281
        %v957 = vsub.f32 %v893, 9.446281
        %v958 = vsub.f32 %v894, 9.446281
        %v959 = vsub.f32 %v895, 9.446281
        %v960 = vsub.f32 %v896, 9.446281
        %v961 = vsub.f32 %v897, 9.446281
        %v962 = vsub.f32 %v898, 9.446281
        %v963 = vsub.f32 %v899, 9.446281
        %v964 = vsub.f32 %v900, 9.446281
        %v965 = vsub.f32 %v901, 9.446281
        %v966 = vsub.f32 %v902, 9.446281
        %v967 = vsub.f32 %v903, 9.446281
        %v968 = vsub.f32 %v904, 9.446281
        %v969 = vsub.f32 %v905, 9.446281
        %v970 = vsub.f32 %v906, 9.446281
        %v971 = vsub.f32 %v907, 9.446281
        %v972 = vmul.f32 %v908, 1.442695
        %v973 = vpow.pop %v972
        %v974 = vmul.f32 %v909, 1.442695
        %v975 = vpow.pop %v974
        %v976 = vmul.f32 %v910, 1.442695
        %v977 = vpow.pop %v976
        %v978 = vmul.f32 %v911, 1.442695
        %v979 = vpow.pop %v978
        %v980 = vmul.f32 %v912, 1.442695
        %v981 = vpow.pop %v980
        %v982 = vmul.f32 %v913, 1.442695
        %v983 = vpow.pop %v982
        %v984 = vmul.f32 %v914, 1.442695
        %v985 = vpow.pop %v984
        %v986 = vmul.f32 %v915, 1.442695
        %v987 = vpow.pop %v986
        %v988 = vmul.f32 %v916, 1.442695
        %v989 = vpow.pop %v988
        %v990 = vmul.f32 %v917, 1.442695
        %v991 = vpow.pop %v990
        %v992 = vmul.f32 %v918, 1.442695
        %v993 = vpow.pop %v992
        %v994 = vmul.f32 %v919, 1.442695
        %v995 = vpow.pop %v994
        %v996 = vmul.f32 %v920, 1.442695
        %v997 = vpow.pop %v996
        %v998 = vmul.f32 %v921, 1.442695
        %v999 = vpow.pop %v998
        %v1000 = vmul.f32 %v922, 1.442695
        %v1001 = vpow.pop %v1000
        %v1002 = vmul.f32 %v923, 1.442695
        %v1003 = vpow.pop %v1002
        %v1004 = vmul.f32 %v924, 1.442695
        %v1005 = vpow.pop %v1004
        %v1006 = vmul.f32 %v925, 1.442695
        %v1007 = vpow.pop %v1006
        %v1008 = vmul.f32 %v926, 1.442695
        %v1009 = vpow.pop %v1008
        %v1010 = vmul.f32 %v927, 1.442695
        %v1011 = vpow.pop %v1010
        %v1012 = vmul.f32 %v928, 1.442695
        %v1013 = vpow.pop %v1012
        %v1014 = vmul.f32 %v929, 1.442695
        %v1015 = vpow.pop %v1014
        %v1016 = vmul.f32 %v930, 1.442695
        %v1017 = vpow.pop %v1016
        %v1018 = vmul.f32 %v931, 1.442695
        %v1019 = vpow.pop %v1018
        %v1020 = vmul.f32 %v932, 1.442695
        %v1021 = vpow.pop %v1020
        %v1022 = vmul.f32 %v933, 1.442695
        %v1023 = vpow.pop %v1022
        %v1024 = vmul.f32 %v934, 1.442695
        %v1025 = vpow.pop %v1024
        %v1026 = vmul.f32 %v935, 1.442695
        %v1027 = vpow.pop %v1026
        %v1028 = vmul.f32 %v936, 1.442695
        %v1029 = vpow.pop %v1028
        %v1030 = vmul.f32 %v937, 1.442695
        %v1031 = vpow.pop %v1030
        %v1032 = vmul.f32 %v938, 1.442695
        %v1033 = vpow.pop %v1032
        %v1034 = vmul.f32 %v939, 1.442695
        %v1035 = vpow.pop %v1034
        %v1036 = vmul.f32 %v940, 1.442695
        %v1037 = vpow.pop %v1036
        %v1038 = vmul.f32 %v941, 1.442695
        %v1039 = vpow.pop %v1038
        %v1040 = vmul.f32 %v942, 1.442695
        %v1041 = vpow.pop %v1040
        %v1042 = vmul.f32 %v943, 1.442695
        %v1043 = vpow.pop %v1042
        %v1044 = vmul.f32 %v944, 1.442695
        %v1045 = vpow.pop %v1044
        %v1046 = vmul.f32 %v945, 1.442695
        %v1047 = vpow.pop %v1046
        %v1048 = vmul.f32 %v946, 1.442695
        %v1049 = vpow.pop %v1048
        %v1050 = vmul.f32 %v947, 1.442695
        %v1051 = vpow.pop %v1050
        %v1052 = vmul.f32 %v948, 1.442695
        %v1053 = vpow.pop %v1052
        %v1054 = vmul.f32 %v949, 1.442695
        %v1055 = vpow.pop %v1054
        %v1056 = vmul.f32 %v950, 1.442695
        %v1057 = vpow.pop %v1056
        %v1058 = vmul.f32 %v951, 1.442695
        %v1059 = vpow.pop %v1058
        %v1060 = vmul.f32 %v952, 1.442695
        %v1061 = vpow.pop %v1060
        %v1062 = vmul.f32 %v953, 1.442695
        %v1063 = vpow.pop %v1062
        %v1064 = vmul.f32 %v954, 1.442695
        %v1065 = vpow.pop %v1064
        %v1066 = vmul.f32 %v955, 1.442695
        %v1067 = vpow.pop %v1066
        %v1068 = vmul.f32 %v956, 1.442695
        %v1069 = vpow.pop %v1068
        %v1070 = vmul.f32 %v957, 1.442695
        %v1071 = vpow.pop %v1070
        %v1072 = vmul.f32 %v958, 1.442695
        %v1073 = vpow.pop %v1072
        %v1074 = vmul.f32 %v959, 1.442695
        %v1075 = vpow.pop %v1074
        %v1076 = vmul.f32 %v960, 1.442695
        %v1077 = vpow.pop %v1076
        %v1078 = vmul.f32 %v961, 1.442695
        %v1079 = vpow.pop %v1078
        %v1080 = vmul.f32 %v962, 1.442695
        %v1081 = vpow.pop %v1080
        %v1082 = vmul.f32 %v963, 1.442695
        %v1083 = vpow.pop %v1082
        %v1084 = vmul.f32 %v964, 1.442695
        %v1085 = vpow.pop %v1084
        %v1086 = vmul.f32 %v965, 1.442695
        %v1087 = vpow.pop %v1086
        %v1088 = vmul.f32 %v966, 1.442695
        %v1089 = vpow.pop %v1088
        %v1090 = vmul.f32 %v967, 1.442695
        %v1091 = vpow.pop %v1090
        %v1092 = vmul.f32 %v968, 1.442695
        %v1093 = vpow.pop %v1092
        %v1094 = vmul.f32 %v969, 1.442695
        %v1095 = vpow.pop %v1094
        %v1096 = vmul.f32 %v970, 1.442695
        %v1097 = vpow.pop %v1096
        %v1098 = vmul.f32 %v971, 1.442695
        %v1099 = vpow.pop %v1098
        %1100 = vst [vmem:[%s181] sm:$0xff] %v973
        %1101 = vst [vmem:[%s181 + $0x8] sm:$0xff] %v975
        %1102 = vst [vmem:[%s181 + $0x10] sm:$0xff] %v977
        %1103 = vst [vmem:[%s181 + $0x18] sm:$0xff] %v979
        %1104 = vst [vmem:[%s181 + $0x20] sm:$0xff] %v981
        %1105 = vst [vmem:[%s181 + $0x28] sm:$0xff] %v983
        %1106 = vst [vmem:[%s181 + $0x30] sm:$0xff] %v985
        %1107 = vst [vmem:[%s181 + $0x38] sm:$0xff] %v987
        %1108 = vst [vmem:[%s181 + $0x40] sm:$0xff] %v989
        %1109 = vst [vmem:[%s181 + $0x48] sm:$0xff] %v991
        %1110 = vst [vmem:[%s181 + $0x50] sm:$0xff] %v993
        %1111 = vst [vmem:[%s181 + $0x58] sm:$0xff] %v995
        %1112 = vst [vmem:[%s181 + $0x60] sm:$0xff] %v997
        %1113 = vst [vmem:[%s181 + $0x68] sm:$0xff] %v999
        %1114 = vst [vmem:[%s181 + $0x70] sm:$0xff] %v1001
        %1115 = vst [vmem:[%s181 + $0x78] sm:$0xff] %v1003
        %1116 = vst [vmem:[%s181 + $0x80] sm:$0xff] %v1005
        %1117 = vst [vmem:[%s181 + $0x88] sm:$0xff] %v1007
        %1118 = vst [vmem:[%s181 + $0x90] sm:$0xff] %v1009
        %1119 = vst [vmem:[%s181 + $0x98] sm:$0xff] %v1011
        %1120 = vst [vmem:[%s181 + $0xa0] sm:$0xff] %v1013
        %1121 = vst [vmem:[%s181 + $0xa8] sm:$0xff] %v1015
        %1122 = vst [vmem:[%s181 + $0xb0] sm:$0xff] %v1017
        %1123 = vst [vmem:[%s181 + $0xb8] sm:$0xff] %v1019
        %1124 = vst [vmem:[%s181 + $0xc0] sm:$0xff] %v1021
        %1125 = vst [vmem:[%s181 + $0xc8] sm:$0xff] %v1023
        %1126 = vst [vmem:[%s181 + $0xd0] sm:$0xff] %v1025
        %1127 = vst [vmem:[%s181 + $0xd8] sm:$0xff] %v1027
        %1128 = vst [vmem:[%s181 + $0xe0] sm:$0xff] %v1029
        %1129 = vst [vmem:[%s181 + $0xe8] sm:$0xff] %v1031
        %1130 = vst [vmem:[%s181 + $0xf0] sm:$0xff] %v1033
        %1131 = vst [vmem:[%s181 + $0xf8] sm:$0xff] %v1035
        %1132 = vst [vmem:[%s181 + $0x100] sm:$0xff] %v1037
        %1133 = vst [vmem:[%s181 + $0x108] sm:$0xff] %v1039
        %1134 = vst [vmem:[%s181 + $0x110] sm:$0xff] %v1041
        %1135 = vst [vmem:[%s181 + $0x118] sm:$0xff] %v1043
        %1136 = vst [vmem:[%s181 + $0x120] sm:$0xff] %v1045
        %1137 = vst [vmem:[%s181 + $0x128] sm:$0xff] %v1047
        %1138 = vst [vmem:[%s181 + $0x130] sm:$0xff] %v1049
        %1139 = vst [vmem:[%s181 + $0x138] sm:$0xff] %v1051
        %1140 = vst [vmem:[%s181 + $0x140] sm:$0xff] %v1053
        %1141 = vst [vmem:[%s181 + $0x148] sm:$0xff] %v1055
        %1142 = vst [vmem:[%s181 + $0x150] sm:$0xff] %v1057
        %1143 = vst [vmem:[%s181 + $0x158] sm:$0xff] %v1059
        %1144 = vst [vmem:[%s181 + $0x160] sm:$0xff] %v1061
        %1145 = vst [vmem:[%s181 + $0x168] sm:$0xff] %v1063
        %1146 = vst [vmem:[%s181 + $0x170] sm:$0xff] %v1065
        %1147 = vst [vmem:[%s181 + $0x178] sm:$0xff] %v1067
        %1148 = vst [vmem:[%s181 + $0x180] sm:$0xff] %v1069
        %1149 = vst [vmem:[%s181 + $0x188] sm:$0xff] %v1071
        %1150 = vst [vmem:[%s181 + $0x190] sm:$0xff] %v1073
        %1151 = vst [vmem:[%s181 + $0x198] sm:$0xff] %v1075
        %1152 = vst [vmem:[%s181 + $0x1a0] sm:$0xff] %v1077
        %1153 = vst [vmem:[%s181 + $0x1a8] sm:$0xff] %v1079
        %1154 = vst [vmem:[%s181 + $0x1b0] sm:$0xff] %v1081
        %1155 = vst [vmem:[%s181 + $0x1b8] sm:$0xff] %v1083
        %1156 = vst [vmem:[%s181 + $0x1c0] sm:$0xff] %v1085
        %1157 = vst [vmem:[%s181 + $0x1c8] sm:$0xff] %v1087
        %1158 = vst [vmem:[%s181 + $0x1d0] sm:$0xff] %v1089
        %1159 = vst [vmem:[%s181 + $0x1d8] sm:$0xff] %v1091
        %1160 = vst [vmem:[%s181 + $0x1e0] sm:$0xff] %v1093
        %1161 = vst [vmem:[%s181 + $0x1e8] sm:$0xff] %v1095
        %1162 = vst [vmem:[%s181 + $0x1f0] sm:$0xff] %v1097
        %1163 = vst [vmem:[%s181 + $0x1f8] sm:$0xff] %v1099
        %s1164 = sand.u32 %s92, 1
        %s1165 = scalar_lea.sflag [#allocation3], %s1164
        %s1166 = sand.u32 %s92, 1
        %s1167 = smul.addr %s1166, 512
        %s1168 = scalar_lea.vmem [#allocation2], %s1167
        // Predicated region
        $region29: #{_lambda_.3} parent=27 // pred_check
          %p1169 = pneg %p102
        $region30: #{_lambda_.3} parent=27 // pred_check_branch
          %1171 = sbr.rel (%p1169) target = $region32
        $region31: #{_lambda_.3} parent=27 // pred_region
          %s1172 = smul.u32 32, %s20
          %s1174 = ssub.s32 8192, 8192
          %1175 = vsyncadd %s1165, %s1174
          %s1176 = smul.addr %s1172, 2
          %s1177 = smul.addr %s21, 64
          %s1178 = sadd.s32 %s1176, %s1177
          %s1179 = smul.addr %s1178, 128
          %s1180 = scalar_lea.hbm %s2, %s1179
          %s1181 = sshll.u32 %s1168, 4
          %s1182 = int_to_ptr.vmem [resolvable:$true] %s1181
          %1187 = dma.vmem_to_hbm [thread:$0]  %s1182, 8192, %s1180, %s1165, 256, 256, 16
        $region32: #{_lambda_.3} parent=27 // pred_fallthru
          _
      $region28: #{_lambda_.3} parent=5 // pred_fallthru
        _
      %p1188 = scmp.le.s32.totalorder 2, %s11
      // Predicated region
      $region33: #{_lambda_.3} parent=5 // pred_check
        %p1189 = pneg %p1188
      $region34: #{_lambda_.3} parent=5 // pred_check_branch
        %1191 = sbr.rel (%p1189) target = $region36
      $region35: #{_lambda_.3} parent=5 // pred_region
        %s1192 = ssub.s32 %s11, 2
        // Predicated region
        $region37: #{_lambda_.3} parent=35 // pred_check
          %p1193 = pneg %p108
        $region38: #{_lambda_.3} parent=35 // pred_check_branch
          %1195 = sbr.rel (%p1193) target = $region40
        $region39: #{_lambda_.3} parent=35 // pred_region
          %s1196 = sand.u32 %s93, 1
          %s1197 = scalar_lea.sflag [#allocation3], %s1196
          %s1198 = sand.u32 %s93, 1
          %s1199 = smul.addr %s1198, 512
          %s1200 = scalar_lea.vmem [#allocation2], %s1199
          %1201 = dma.done %s1197, 8192
        $region40: #{_lambda_.3} parent=35 // pred_fallthru
          _
      $region36: #{_lambda_.3} parent=5 // pred_fallthru
        _
    $region6: #{_lambda_.3} parent=1 // loop_footer
      %s15 = sadd.s32 1, %s11
    $region7: #{_lambda_.3} parent=1 // loop_footer_branch
      %10 = sbr.rel target = $region3
    $region8: #{_lambda_.3} parent=1 // loop_exit
      _
    %1202 = vsyncpa [#allocation3], 1
    %s1203 = scalar_lea.sflag [#allocation3], 1
    %1204 = vsyncpa %s1203, 1

</llo_original>
